<compile_context>
chip_gen: v6e
topology: v6e:2x2x1
jax: 0.10.0
libtpu: 0.0.40
codegen_flags: <defaults>
</compile_context>

<pallas_src>
import jax
import jax.numpy as jnp
from jax.experimental import pallas as pl
from jax.experimental.pallas import tpu as pltpu

INPUT_SIZE = 784
HIDDEN = 100
NUM_CLASSES = 10

# Lane-dense padded dims.
K_PAD = 896    # 7 * 128  (contraction of first matmul)
H_PAD = 128    # hidden
C_PAD = 128    # output classes


def mlp_kernel(x_ref, w1_ref, b1_ref, w2_ref, b2_ref, o_ref):
    # fc1: bf16 MXU matmul, f32 accumulate; bias + ReLU in f32 on the VPU.
    h = jnp.dot(x_ref[...], w1_ref[...], preferred_element_type=jnp.float32)
    h = jnp.maximum(h + b1_ref[...], 0.0)
    # fc2: cast activations back to bf16 for the MXU, accumulate f32.
    o = jnp.dot(h.astype(w2_ref.dtype), w2_ref[...],
                preferred_element_type=jnp.float32)
    o_ref[...] = (o + b2_ref[...]).astype(o_ref.dtype)


def mlp_forward(x, w1, b1, w2, b2, *, batch_tile=256,
                compute_dtype=jnp.bfloat16):
    """x: (B, 784) f32; w1: (784, 100); b1: (100,); w2: (100, 10); b2: (10,)."""
    B, D = x.shape
    assert D == INPUT_SIZE

    # Pad batch to a multiple of the tile; pad feature dims to lane-dense sizes.
    n_tiles = pl.cdiv(B, batch_tile)
    Bp = n_tiles * batch_tile

    xp = jnp.zeros((Bp, K_PAD), compute_dtype).at[:B, :D].set(
        x.astype(compute_dtype))
    w1p = jnp.zeros((K_PAD, H_PAD), compute_dtype).at[:D, :HIDDEN].set(
        w1.astype(compute_dtype))
    b1p = jnp.zeros((1, H_PAD), jnp.float32).at[:, :HIDDEN].set(
        b1.reshape(1, HIDDEN).astype(jnp.float32))
    w2p = jnp.zeros((H_PAD, C_PAD), compute_dtype).at[:HIDDEN, :NUM_CLASSES].set(
        w2.astype(compute_dtype))
    b2p = jnp.zeros((1, C_PAD), jnp.float32).at[:, :NUM_CLASSES].set(
        b2.reshape(1, NUM_CLASSES).astype(jnp.float32))

    out_padded = pl.pallas_call(
        mlp_kernel,
        out_shape=jax.ShapeDtypeStruct((Bp, C_PAD), jnp.float32),
        grid_spec=pltpu.PrefetchScalarGridSpec(
            num_scalar_prefetch=0,
            grid=(n_tiles,),
            in_specs=[
                # Streamed x tile per grid step.
                pl.BlockSpec((batch_tile, K_PAD), lambda i: (i, 0)),
                # Weights/biases: constant block index -> fetched once, resident.
                pl.BlockSpec((K_PAD, H_PAD), lambda i: (0, 0)),
                pl.BlockSpec((1, H_PAD), lambda i: (0, 0)),
                pl.BlockSpec((H_PAD, C_PAD), lambda i: (0, 0)),
                pl.BlockSpec((1, C_PAD), lambda i: (0, 0)),
            ],
            out_specs=pl.BlockSpec((batch_tile, C_PAD), lambda i: (i, 0)),
        ),
        compiler_params=pltpu.CompilerParams(
            dimension_semantics=("parallel",),
        ),
    )(xp, w1p, b1p, w2p, b2p)

    # Slice away batch padding and the padded class columns.
    return out_padded[:B, :NUM_CLASSES]


def init_params(key):
    # Deterministic init mimicking torch.nn.Linear (uniform +/- 1/sqrt(fan_in)).
    k1, k2, k3, k4 = jax.random.split(key, 4)
    bound1 = 1.0 / (INPUT_SIZE ** 0.5)
    bound2 = 1.0 / (HIDDEN ** 0.5)
    w1 = jax.random.uniform(k1, (INPUT_SIZE, HIDDEN), jnp.float32, -bound1, bound1)
    b1 = jax.random.uniform(k2, (HIDDEN,), jnp.float32, -bound1, bound1)
    w2 = jax.random.uniform(k3, (HIDDEN, NUM_CLASSES), jnp.float32, -bound2, bound2)
    b2 = jax.random.uniform(k4, (NUM_CLASSES,), jnp.float32, -bound2, bound2)
    return w1, b1, w2, b2


if __name__ == "__main__":
    key = jax.random.PRNGKey(0)
    kx, kp = jax.random.split(key)
    B = 8  # small test batch; wrapper pads to one 256-row tile internally
    x = jax.random.normal(kx, (B, INPUT_SIZE), jnp.float32)
    w1, b1, w2, b2 = init_params(kp)

    out = mlp_forward(x, w1, b1, w2, b2)
    out = jax.block_until_ready(out)

    # Reference in plain f32 JAX (same math as torch fc2(relu(fc1(x)))).
    ref = jnp.maximum(x @ w1 + b1[None, :], 0.0) @ w2 + b2[None, :]
    assert out.shape == (B, NUM_CLASSES)
    # bf16 MXU inputs with f32 accumulation => small relative error vs f32 ref.
    assert jnp.allclose(out, ref, atol=5e-2, rtol=5e-2), (
        float(jnp.max(jnp.abs(out - ref))))

    print("KERNEL_OK")
</pallas_src>

<mosaic_0001>
module attributes {stable_mosaic.version = 11 : i64} {
  func.func @mlp_kernel(%arg0: i32, %arg1: memref<256x896xbf16, #tpu.memory_space<vmem>>, %arg2: memref<896x128xbf16, #tpu.memory_space<vmem>>, %arg3: memref<1x128xf32, #tpu.memory_space<vmem>>, %arg4: memref<128x128xbf16, #tpu.memory_space<vmem>>, %arg5: memref<1x128xf32, #tpu.memory_space<vmem>>, %arg6: memref<256x128xf32, #tpu.memory_space<vmem>>) attributes {dimension_semantics = [#tpu.dimension_semantics<parallel>], iteration_bounds = array<i64: 1>, scalar_prefetch = 0 : i64, scratch_operands = 0 : i64, tpu.core_type = #tpu.core_type<tc>, window_params = [{transform_indices = @transform_0, window_bounds = array<i64: 256, 896>}, {pipeline_mode = #tpu.pipeline_mode<synchronous>, transform_indices = @transform_1, window_bounds = array<i64: 896, 128>}, {pipeline_mode = #tpu.pipeline_mode<synchronous>, transform_indices = @transform_2, window_bounds = array<i64: 1, 128>}, {pipeline_mode = #tpu.pipeline_mode<synchronous>, transform_indices = @transform_3, window_bounds = array<i64: 128, 128>}, {pipeline_mode = #tpu.pipeline_mode<synchronous>, transform_indices = @transform_4, window_bounds = array<i64: 1, 128>}, {transform_indices = @transform_5, window_bounds = array<i64: 256, 128>}]} {
    %c0 = arith.constant 0 : index
    %c0_0 = arith.constant 0 : index
    %0 = vector.load %arg1[%c0, %c0_0] : memref<256x896xbf16, #tpu.memory_space<vmem>>, vector<256x896xbf16>
    %c0_1 = arith.constant 0 : index
    %c0_2 = arith.constant 0 : index
    %1 = vector.load %arg2[%c0_1, %c0_2] : memref<896x128xbf16, #tpu.memory_space<vmem>>, vector<896x128xbf16>
    %cst = arith.constant dense<0.000000e+00> : vector<256x128xf32>
    %2 = tpu.matmul %0, %1, %cst {dimension_numbers = #tpu.dot_dimension_numbers<[1], [0], [0], [1], [0, 0, 1, 1], [], []>} : vector<256x896xbf16>, vector<896x128xbf16>, vector<256x128xf32> -> vector<256x128xf32>
    %c0_3 = arith.constant 0 : index
    %c0_4 = arith.constant 0 : index
    %3 = vector.load %arg3[%c0_3, %c0_4] : memref<1x128xf32, #tpu.memory_space<vmem>>, vector<1x128xf32>
    %4 = vector.broadcast %3 : vector<1x128xf32> to vector<256x128xf32>
    %5 = arith.addf %2, %4 : vector<256x128xf32>
    %cst_5 = arith.constant 0.000000e+00 : f32
    %6 = vector.broadcast %cst_5 : f32 to vector<256x128xf32>
    %7 = arith.maximumf %5, %6 : vector<256x128xf32>
    %8 = arith.truncf %7 : vector<256x128xf32> to vector<256x128xbf16>
    %c0_6 = arith.constant 0 : index
    %c0_7 = arith.constant 0 : index
    %9 = vector.load %arg4[%c0_6, %c0_7] : memref<128x128xbf16, #tpu.memory_space<vmem>>, vector<128x128xbf16>
    %cst_8 = arith.constant dense<0.000000e+00> : vector<256x128xf32>
    %10 = tpu.matmul %8, %9, %cst_8 {dimension_numbers = #tpu.dot_dimension_numbers<[1], [0], [0], [1], [0, 0, 1, 1], [], []>} : vector<256x128xbf16>, vector<128x128xbf16>, vector<256x128xf32> -> vector<256x128xf32>
    %c0_9 = arith.constant 0 : index
    %c0_10 = arith.constant 0 : index
    %11 = vector.load %arg5[%c0_9, %c0_10] : memref<1x128xf32, #tpu.memory_space<vmem>>, vector<1x128xf32>
    %12 = vector.broadcast %11 : vector<1x128xf32> to vector<256x128xf32>
    %13 = arith.addf %10, %12 : vector<256x128xf32>
    %c0_11 = arith.constant 0 : index
    %c0_12 = arith.constant 0 : index
    %14 = vector.load %arg6[%c0_11, %c0_12] : memref<256x128xf32, #tpu.memory_space<vmem>>, vector<256x128xf32>
    tpu.vector_store %arg6[%c0_11, %c0_12], %13 {strides = array<i32>} : memref<256x128xf32, #tpu.memory_space<vmem>>, vector<256x128xf32>,
    return
  }
  func.func @transform_0(%arg0: i32) -> (i32, i32) {
    %c0_i32 = arith.constant 0 : i32
    %c0_i32_0 = arith.constant 0 : i32
    return %arg0, %c0_i32 : i32, i32
  }
  func.func @transform_1(%arg0: i32) -> (i32, i32) {
    %c0_i32 = arith.constant 0 : i32
    %c0_i32_0 = arith.constant 0 : i32
    %c0_i32_1 = arith.constant 0 : i32
    return %c0_i32, %c0_i32_0 : i32, i32
  }
  func.func @transform_2(%arg0: i32) -> (i32, i32) {
    %c0_i32 = arith.constant 0 : i32
    %c0_i32_0 = arith.constant 0 : i32
    %c0_i32_1 = arith.constant 0 : i32
    return %c0_i32, %c0_i32_0 : i32, i32
  }
  func.func @transform_3(%arg0: i32) -> (i32, i32) {
    %c0_i32 = arith.constant 0 : i32
    %c0_i32_0 = arith.constant 0 : i32
    %c0_i32_1 = arith.constant 0 : i32
    return %c0_i32, %c0_i32_0 : i32, i32
  }
  func.func @transform_4(%arg0: i32) -> (i32, i32) {
    %c0_i32 = arith.constant 0 : i32
    %c0_i32_0 = arith.constant 0 : i32
    %c0_i32_1 = arith.constant 0 : i32
    return %c0_i32, %c0_i32_0 : i32, i32
  }
  func.func @transform_5(%arg0: i32) -> (i32, i32) {
    %c0_i32 = arith.constant 0 : i32
    %c0_i32_0 = arith.constant 0 : i32
    return %arg0, %c0_i32 : i32, i32
  }
}

</mosaic_0001>

<llo_original>
// kernel: tpu_custom_call.1
$region0: #{tpu_custom_call.1}
  #allocation0 [shape = 'u32[]', space=smem, size = 0x4, offset = 0x4, fixed_abs, tag = 'smem constant byte address 0x4 - core index']
  #allocation1 [shape = 'u32[144,128]{1,0:T(1,128)}', space=vmem, size = 0x12000, scoped, tag = 'internal scratch']
  %s0 = inlined_call_operand.hbm [shape: bf16[256,896], index: 0, kind: input, shape index: {}]
  %s1 = inlined_call_operand.hbm [shape: bf16[896,128], index: 1, kind: input, shape index: {}]
  %s2 = inlined_call_operand.vmem [shape: f32[1,128], index: 2, kind: input, shape index: {}]
  %s3 = inlined_call_operand.hbm [shape: bf16[128,128], index: 3, kind: input, shape index: {}]
  %s4 = inlined_call_operand.vmem [shape: f32[1,128], index: 4, kind: input, shape index: {}]
  %s5 = inlined_call_operand.hbm [shape: f32[256,128], index: 5, kind: output, shape index: {}]
  %s6 = sld [smem:[#allocation0]]
  $region42: #{tpu_custom_call.1} parent=0
    _
  %s8 = ssub.s32 1, %s6
  %s9 = scalar_select 0, %s8, %s6
  $region1: #{tpu_custom_call.1} parent=0
    #allocation2 [shape = 'u8[458752]{0}', space=vmem, size = 0x70000, scoped, tag = 'input window, operand 0, single buffered']
    #allocation3 [shape = 's32[1]{0}', space=sflag, size = 0x4, scoped, tag = 'scoped memory for tpu_custom_call.1']
    #allocation4 [shape = 's32[1]{0}', space=sflag, size = 0x4, scoped, tag = 'scoped memory for tpu_custom_call.1']
    #allocation5 [shape = 'u8[229376]{0}', space=vmem, size = 0x38000, scoped, tag = 'input window, operand 1, single buffered']
    #allocation6 [shape = 's32[1]{0}', space=sflag, size = 0x4, scoped, tag = 'scoped memory for tpu_custom_call.1']
    #allocation7 [shape = 'u8[32768]{0}', space=vmem, size = 0x8000, scoped, tag = 'input window, operand 3, single buffered']
    #allocation8 [shape = 'u8[131072]{0}', space=vmem, size = 0x20000, scoped, tag = 'output window, operand 0, single buffered']
    %10 = vsyncpa [#allocation3], 0
    %11 = vsyncpa [#allocation6], 0
    %12 = vsyncpa [#allocation4], 0
    // Predicated region
    $region2: #{tpu_custom_call.1} parent=1 // pred_check
      _
    $region3: #{tpu_custom_call.1} parent=1 // pred_check_branch
      %14 = sbr.rel (0) target = $region5
    $region4: #{tpu_custom_call.1} parent=1 // pred_region
      %s16 = ssub.s32 14336, 14336
      %17 = vsyncadd [#allocation3], %s16
      %s18 = sshll.u32 [#allocation2], 4
      %s19 = int_to_ptr.vmem [resolvable:$true] %s18
      %24 = dma.hbm_to_vmem [thread:$0]  %s0, 14336, %s19, [#allocation3], 448, 448, 28
    $region5: #{tpu_custom_call.1} parent=1 // pred_fallthru
      _
    // Predicated region
    $region6: #{tpu_custom_call.1} parent=1 // pred_check
      _
    $region7: #{tpu_custom_call.1} parent=1 // pred_check_branch
      %26 = sbr.rel (0) target = $region9
    $region8: #{tpu_custom_call.1} parent=1 // pred_region
      %s28 = ssub.s32 7168, 7168
      %29 = vsyncadd [#allocation6], %s28
      %s30 = sshll.u32 [#allocation5], 4
      %s31 = int_to_ptr.vmem [resolvable:$true] %s30
      %36 = dma.hbm_to_vmem [thread:$0]  %s1, 7168, %s31, [#allocation6], 64, 64, 4
    $region9: #{tpu_custom_call.1} parent=1 // pred_fallthru
      _
    // Predicated region
    $region10: #{tpu_custom_call.1} parent=1 // pred_check
      _
    $region11: #{tpu_custom_call.1} parent=1 // pred_check_branch
      %38 = sbr.rel (0) target = $region13
    $region12: #{tpu_custom_call.1} parent=1 // pred_region
      _
    $region13: #{tpu_custom_call.1} parent=1 // pred_fallthru
      _
    // Predicated region
    $region14: #{tpu_custom_call.1} parent=1 // pred_check
      _
    $region15: #{tpu_custom_call.1} parent=1 // pred_check_branch
      %40 = sbr.rel (0) target = $region17
    $region16: #{tpu_custom_call.1} parent=1 // pred_region
      %s42 = ssub.s32 1024, 1024
      %43 = vsyncadd [#allocation6], %s42
      %s44 = sshll.u32 [#allocation7], 4
      %s45 = int_to_ptr.vmem [resolvable:$true] %s44
      %50 = dma.hbm_to_vmem [thread:$0]  %s3, 1024, %s45, [#allocation6], 64, 64, 4
    $region17: #{tpu_custom_call.1} parent=1 // pred_fallthru
      _
    // Predicated region
    $region18: #{tpu_custom_call.1} parent=1 // pred_check
      _
    $region19: #{tpu_custom_call.1} parent=1 // pred_check_branch
      %52 = sbr.rel (0) target = $region21
    $region20: #{tpu_custom_call.1} parent=1 // pred_region
      _
    $region21: #{tpu_custom_call.1} parent=1 // pred_fallthru
      _
    // Predicated region
    $region22: #{tpu_custom_call.1} parent=1 // pred_check
      _
    $region23: #{tpu_custom_call.1} parent=1 // pred_check_branch
      %54 = sbr.rel (0) target = $region25
    $region24: #{tpu_custom_call.1} parent=1 // pred_region
      %55 = dma.done [#allocation3], 14336
    $region25: #{tpu_custom_call.1} parent=1 // pred_fallthru
      _
    // Predicated region
    $region26: #{tpu_custom_call.1} parent=1 // pred_check
      _
    $region27: #{tpu_custom_call.1} parent=1 // pred_check_branch
      %57 = sbr.rel (0) target = $region29
    $region28: #{tpu_custom_call.1} parent=1 // pred_region
      %58 = dma.done [#allocation6], 7168
    $region29: #{tpu_custom_call.1} parent=1 // pred_fallthru
      _
    // Predicated region
    $region30: #{tpu_custom_call.1} parent=1 // pred_check
      _
    $region31: #{tpu_custom_call.1} parent=1 // pred_check_branch
      %60 = sbr.rel (0) target = $region33
    $region32: #{tpu_custom_call.1} parent=1 // pred_region
      %61 = dma.done [#allocation6], 1024
    $region33: #{tpu_custom_call.1} parent=1 // pred_fallthru
      _
    %v63 = vld [vmem:[#allocation2] sm:$0xff]
    %v64 = vld [vmem:[#allocation2 + $0x8] sm:$0xff]
    %v65 = vld [vmem:[#allocation2 + $0x10] sm:$0xff]
    %v66 = vld [vmem:[#allocation2 + $0x18] sm:$0xf]
    %v67 = vld [vmem:[#allocation2 + $0x1c] sm:$0xff]
    %v68 = vld [vmem:[#allocation2 + $0x24] sm:$0xff]
    %v69 = vld [vmem:[#allocation2 + $0x2c] sm:$0xff]
    %v70 = vld [vmem:[#allocation2 + $0x34] sm:$0xf]
    %v71 = vld [vmem:[#allocation2 + $0x38] sm:$0xff]
    %v72 = vld [vmem:[#allocation2 + $0x40] sm:$0xff]
    %v73 = vld [vmem:[#allocation2 + $0x48] sm:$0xff]
    %v74 = vld [vmem:[#allocation2 + $0x50] sm:$0xf]
    %v75 = vld [vmem:[#allocation2 + $0x54] sm:$0xff]
    %v76 = vld [vmem:[#allocation2 + $0x5c] sm:$0xff]
    %v77 = vld [vmem:[#allocation2 + $0x64] sm:$0xff]
    %v78 = vld [vmem:[#allocation2 + $0x6c] sm:$0xf]
    %v79 = vld [vmem:[#allocation2 + $0x70] sm:$0xff]
    %v80 = vld [vmem:[#allocation2 + $0x78] sm:$0xff]
    %v81 = vld [vmem:[#allocation2 + $0x80] sm:$0xff]
    %v82 = vld [vmem:[#allocation2 + $0x88] sm:$0xf]
    %v83 = vld [vmem:[#allocation2 + $0x8c] sm:$0xff]
    %v84 = vld [vmem:[#allocation2 + $0x94] sm:$0xff]
    %v85 = vld [vmem:[#allocation2 + $0x9c] sm:$0xff]
    %v86 = vld [vmem:[#allocation2 + $0xa4] sm:$0xf]
    %v87 = vld [vmem:[#allocation2 + $0xa8] sm:$0xff]
    %v88 = vld [vmem:[#allocation2 + $0xb0] sm:$0xff]
    %v89 = vld [vmem:[#allocation2 + $0xb8] sm:$0xff]
    %v90 = vld [vmem:[#allocation2 + $0xc0] sm:$0xf]
    %v91 = vld [vmem:[#allocation2 + $0xc4] sm:$0xff]
    %v92 = vld [vmem:[#allocation2 + $0xcc] sm:$0xff]
    %v93 = vld [vmem:[#allocation2 + $0xd4] sm:$0xff]
    %v94 = vld [vmem:[#allocation2 + $0xdc] sm:$0xf]
    %v95 = vld [vmem:[#allocation2 + $0xe0] sm:$0xff]
    %v96 = vld [vmem:[#allocation2 + $0xe8] sm:$0xff]
    %v97 = vld [vmem:[#allocation2 + $0xf0] sm:$0xff]
    %v98 = vld [vmem:[#allocation2 + $0xf8] sm:$0xf]
    %v99 = vld [vmem:[#allocation2 + $0xfc] sm:$0xff]
    %v100 = vld [vmem:[#allocation2 + $0x104] sm:$0xff]
    %v101 = vld [vmem:[#allocation2 + $0x10c] sm:$0xff]
    %v102 = vld [vmem:[#allocation2 + $0x114] sm:$0xf]
    %v103 = vld [vmem:[#allocation2 + $0x118] sm:$0xff]
    %v104 = vld [vmem:[#allocation2 + $0x120] sm:$0xff]
    %v105 = vld [vmem:[#allocation2 + $0x128] sm:$0xff]
    %v106 = vld [vmem:[#allocation2 + $0x130] sm:$0xf]
    %v107 = vld [vmem:[#allocation2 + $0x134] sm:$0xff]
    %v108 = vld [vmem:[#allocation2 + $0x13c] sm:$0xff]
    %v109 = vld [vmem:[#allocation2 + $0x144] sm:$0xff]
    %v110 = vld [vmem:[#allocation2 + $0x14c] sm:$0xf]
    %v111 = vld [vmem:[#allocation2 + $0x150] sm:$0xff]
    %v112 = vld [vmem:[#allocation2 + $0x158] sm:$0xff]
    %v113 = vld [vmem:[#allocation2 + $0x160] sm:$0xff]
    %v114 = vld [vmem:[#allocation2 + $0x168] sm:$0xf]
    %v115 = vld [vmem:[#allocation2 + $0x16c] sm:$0xff]
    %v116 = vld [vmem:[#allocation2 + $0x174] sm:$0xff]
    %v117 = vld [vmem:[#allocation2 + $0x17c] sm:$0xff]
    %v118 = vld [vmem:[#allocation2 + $0x184] sm:$0xf]
    %v119 = vld [vmem:[#allocation2 + $0x188] sm:$0xff]
    %v120 = vld [vmem:[#allocation2 + $0x190] sm:$0xff]
    %v121 = vld [vmem:[#allocation2 + $0x198] sm:$0xff]
    %v122 = vld [vmem:[#allocation2 + $0x1a0] sm:$0xf]
    %v123 = vld [vmem:[#allocation2 + $0x1a4] sm:$0xff]
    %v124 = vld [vmem:[#allocation2 + $0x1ac] sm:$0xff]
    %v125 = vld [vmem:[#allocation2 + $0x1b4] sm:$0xff]
    %v126 = vld [vmem:[#allocation2 + $0x1bc] sm:$0xf]
    %v127 = vld [vmem:[#allocation2 + $0x1c0] sm:$0xff]
    %v128 = vld [vmem:[#allocation2 + $0x1c8] sm:$0xff]
    %v129 = vld [vmem:[#allocation2 + $0x1d0] sm:$0xff]
    %v130 = vld [vmem:[#allocation2 + $0x1d8] sm:$0xf]
    %v131 = vld [vmem:[#allocation2 + $0x1dc] sm:$0xff]
    %v132 = vld [vmem:[#allocation2 + $0x1e4] sm:$0xff]
    %v133 = vld [vmem:[#allocation2 + $0x1ec] sm:$0xff]
    %v134 = vld [vmem:[#allocation2 + $0x1f4] sm:$0xf]
    %v135 = vld [vmem:[#allocation2 + $0x1f8] sm:$0xff]
    %v136 = vld [vmem:[#allocation2 + $0x200] sm:$0xff]
    %v137 = vld [vmem:[#allocation2 + $0x208] sm:$0xff]
    %v138 = vld [vmem:[#allocation2 + $0x210] sm:$0xf]
    %v139 = vld [vmem:[#allocation2 + $0x214] sm:$0xff]
    %v140 = vld [vmem:[#allocation2 + $0x21c] sm:$0xff]
    %v141 = vld [vmem:[#allocation2 + $0x224] sm:$0xff]
    %v142 = vld [vmem:[#allocation2 + $0x22c] sm:$0xf]
    %v143 = vld [vmem:[#allocation2 + $0x230] sm:$0xff]
    %v144 = vld [vmem:[#allocation2 + $0x238] sm:$0xff]
    %v145 = vld [vmem:[#allocation2 + $0x240] sm:$0xff]
    %v146 = vld [vmem:[#allocation2 + $0x248] sm:$0xf]
    %v147 = vld [vmem:[#allocation2 + $0x24c] sm:$0xff]
    %v148 = vld [vmem:[#allocation2 + $0x254] sm:$0xff]
    %v149 = vld [vmem:[#allocation2 + $0x25c] sm:$0xff]
    %v150 = vld [vmem:[#allocation2 + $0x264] sm:$0xf]
    %v151 = vld [vmem:[#allocation2 + $0x268] sm:$0xff]
    %v152 = vld [vmem:[#allocation2 + $0x270] sm:$0xff]
    %v153 = vld [vmem:[#allocation2 + $0x278] sm:$0xff]
    %v154 = vld [vmem:[#allocation2 + $0x280] sm:$0xf]
    %v155 = vld [vmem:[#allocation2 + $0x284] sm:$0xff]
    %v156 = vld [vmem:[#allocation2 + $0x28c] sm:$0xff]
    %v157 = vld [vmem:[#allocation2 + $0x294] sm:$0xff]
    %v158 = vld [vmem:[#allocation2 + $0x29c] sm:$0xf]
    %v159 = vld [vmem:[#allocation2 + $0x2a0] sm:$0xff]
    %v160 = vld [vmem:[#allocation2 + $0x2a8] sm:$0xff]
    %v161 = vld [vmem:[#allocation2 + $0x2b0] sm:$0xff]
    %v162 = vld [vmem:[#allocation2 + $0x2b8] sm:$0xf]
    %v163 = vld [vmem:[#allocation2 + $0x2bc] sm:$0xff]
    %v164 = vld [vmem:[#allocation2 + $0x2c4] sm:$0xff]
    %v165 = vld [vmem:[#allocation2 + $0x2cc] sm:$0xff]
    %v166 = vld [vmem:[#allocation2 + $0x2d4] sm:$0xf]
    %v167 = vld [vmem:[#allocation2 + $0x2d8] sm:$0xff]
    %v168 = vld [vmem:[#allocation2 + $0x2e0] sm:$0xff]
    %v169 = vld [vmem:[#allocation2 + $0x2e8] sm:$0xff]
    %v170 = vld [vmem:[#allocation2 + $0x2f0] sm:$0xf]
    %v171 = vld [vmem:[#allocation2 + $0x2f4] sm:$0xff]
    %v172 = vld [vmem:[#allocation2 + $0x2fc] sm:$0xff]
    %v173 = vld [vmem:[#allocation2 + $0x304] sm:$0xff]
    %v174 = vld [vmem:[#allocation2 + $0x30c] sm:$0xf]
    %v175 = vld [vmem:[#allocation2 + $0x310] sm:$0xff]
    %v176 = vld [vmem:[#allocation2 + $0x318] sm:$0xff]
    %v177 = vld [vmem:[#allocation2 + $0x320] sm:$0xff]
    %v178 = vld [vmem:[#allocation2 + $0x328] sm:$0xf]
    %v179 = vld [vmem:[#allocation2 + $0x32c] sm:$0xff]
    %v180 = vld [vmem:[#allocation2 + $0x334] sm:$0xff]
    %v181 = vld [vmem:[#allocation2 + $0x33c] sm:$0xff]
    %v182 = vld [vmem:[#allocation2 + $0x344] sm:$0xf]
    %v183 = vld [vmem:[#allocation2 + $0x348] sm:$0xff]
    %v184 = vld [vmem:[#allocation2 + $0x350] sm:$0xff]
    %v185 = vld [vmem:[#allocation2 + $0x358] sm:$0xff]
    %v186 = vld [vmem:[#allocation2 + $0x360] sm:$0xf]
    %v187 = vld [vmem:[#allocation2 + $0x364] sm:$0xff]
    %v188 = vld [vmem:[#allocation2 + $0x36c] sm:$0xff]
    %v189 = vld [vmem:[#allocation2 + $0x374] sm:$0xff]
    %v190 = vld [vmem:[#allocation2 + $0x37c] sm:$0xf]
    %v191 = vld [vmem:[#allocation5] sm:$0xf]
    %v192 = vld [vmem:[#allocation5 + $0x4] sm:$0xf]
    %v193 = vld [vmem:[#allocation5 + $0x8] sm:$0xf]
    %v194 = vld [vmem:[#allocation5 + $0xc] sm:$0xf]
    %v195 = vld [vmem:[#allocation5 + $0x10] sm:$0xf]
    %v196 = vld [vmem:[#allocation5 + $0x14] sm:$0xf]
    %v197 = vld [vmem:[#allocation5 + $0x18] sm:$0xf]
    %v198 = vld [vmem:[#allocation5 + $0x1c] sm:$0xf]
    %v199 = vld [vmem:[#allocation5 + $0x20] sm:$0xf]
    %v200 = vld [vmem:[#allocation5 + $0x24] sm:$0xf]
    %v201 = vld [vmem:[#allocation5 + $0x28] sm:$0xf]
    %v202 = vld [vmem:[#allocation5 + $0x2c] sm:$0xf]
    %v203 = vld [vmem:[#allocation5 + $0x30] sm:$0xf]
    %v204 = vld [vmem:[#allocation5 + $0x34] sm:$0xf]
    %v205 = vld [vmem:[#allocation5 + $0x38] sm:$0xf]
    %v206 = vld [vmem:[#allocation5 + $0x3c] sm:$0xf]
    %v207 = vld [vmem:[#allocation5 + $0x40] sm:$0xf]
    %v208 = vld [vmem:[#allocation5 + $0x44] sm:$0xf]
    %v209 = vld [vmem:[#allocation5 + $0x48] sm:$0xf]
    %v210 = vld [vmem:[#allocation5 + $0x4c] sm:$0xf]
    %v211 = vld [vmem:[#allocation5 + $0x50] sm:$0xf]
    %v212 = vld [vmem:[#allocation5 + $0x54] sm:$0xf]
    %v213 = vld [vmem:[#allocation5 + $0x58] sm:$0xf]
    %v214 = vld [vmem:[#allocation5 + $0x5c] sm:$0xf]
    %v215 = vld [vmem:[#allocation5 + $0x60] sm:$0xf]
    %v216 = vld [vmem:[#allocation5 + $0x64] sm:$0xf]
    %v217 = vld [vmem:[#allocation5 + $0x68] sm:$0xf]
    %v218 = vld [vmem:[#allocation5 + $0x6c] sm:$0xf]
    %v219 = vld [vmem:[#allocation5 + $0x70] sm:$0xf]
    %v220 = vld [vmem:[#allocation5 + $0x74] sm:$0xf]
    %v221 = vld [vmem:[#allocation5 + $0x78] sm:$0xf]
    %v222 = vld [vmem:[#allocation5 + $0x7c] sm:$0xf]
    %v223 = vld [vmem:[#allocation5 + $0x80] sm:$0xf]
    %v224 = vld [vmem:[#allocation5 + $0x84] sm:$0xf]
    %v225 = vld [vmem:[#allocation5 + $0x88] sm:$0xf]
    %v226 = vld [vmem:[#allocation5 + $0x8c] sm:$0xf]
    %v227 = vld [vmem:[#allocation5 + $0x90] sm:$0xf]
    %v228 = vld [vmem:[#allocation5 + $0x94] sm:$0xf]
    %v229 = vld [vmem:[#allocation5 + $0x98] sm:$0xf]
    %v230 = vld [vmem:[#allocation5 + $0x9c] sm:$0xf]
    %v231 = vld [vmem:[#allocation5 + $0xa0] sm:$0xf]
    %v232 = vld [vmem:[#allocation5 + $0xa4] sm:$0xf]
    %v233 = vld [vmem:[#allocation5 + $0xa8] sm:$0xf]
    %v234 = vld [vmem:[#allocation5 + $0xac] sm:$0xf]
    %v235 = vld [vmem:[#allocation5 + $0xb0] sm:$0xf]
    %v236 = vld [vmem:[#allocation5 + $0xb4] sm:$0xf]
    %v237 = vld [vmem:[#allocation5 + $0xb8] sm:$0xf]
    %v238 = vld [vmem:[#allocation5 + $0xbc] sm:$0xf]
    %v239 = vld [vmem:[#allocation5 + $0xc0] sm:$0xf]
    %v240 = vld [vmem:[#allocation5 + $0xc4] sm:$0xf]
    %v241 = vld [vmem:[#allocation5 + $0xc8] sm:$0xf]
    %v242 = vld [vmem:[#allocation5 + $0xcc] sm:$0xf]
    %v243 = vld [vmem:[#allocation5 + $0xd0] sm:$0xf]
    %v244 = vld [vmem:[#allocation5 + $0xd4] sm:$0xf]
    %v245 = vld [vmem:[#allocation5 + $0xd8] sm:$0xf]
    %v246 = vld [vmem:[#allocation5 + $0xdc] sm:$0xf]
    %v247 = vld [vmem:[#allocation5 + $0xe0] sm:$0xf]
    %v248 = vld [vmem:[#allocation5 + $0xe4] sm:$0xf]
    %v249 = vld [vmem:[#allocation5 + $0xe8] sm:$0xf]
    %v250 = vld [vmem:[#allocation5 + $0xec] sm:$0xf]
    %v251 = vld [vmem:[#allocation5 + $0xf0] sm:$0xf]
    %v252 = vld [vmem:[#allocation5 + $0xf4] sm:$0xf]
    %v253 = vld [vmem:[#allocation5 + $0xf8] sm:$0xf]
    %v254 = vld [vmem:[#allocation5 + $0xfc] sm:$0xf]
    %v255 = vld [vmem:[#allocation5 + $0x100] sm:$0xf]
    %v256 = vld [vmem:[#allocation5 + $0x104] sm:$0xf]
    %v257 = vld [vmem:[#allocation5 + $0x108] sm:$0xf]
    %v258 = vld [vmem:[#allocation5 + $0x10c] sm:$0xf]
    %v259 = vld [vmem:[#allocation5 + $0x110] sm:$0xf]
    %v260 = vld [vmem:[#allocation5 + $0x114] sm:$0xf]
    %v261 = vld [vmem:[#allocation5 + $0x118] sm:$0xf]
    %v262 = vld [vmem:[#allocation5 + $0x11c] sm:$0xf]
    %v263 = vld [vmem:[#allocation5 + $0x120] sm:$0xf]
    %v264 = vld [vmem:[#allocation5 + $0x124] sm:$0xf]
    %v265 = vld [vmem:[#allocation5 + $0x128] sm:$0xf]
    %v266 = vld [vmem:[#allocation5 + $0x12c] sm:$0xf]
    %v267 = vld [vmem:[#allocation5 + $0x130] sm:$0xf]
    %v268 = vld [vmem:[#allocation5 + $0x134] sm:$0xf]
    %v269 = vld [vmem:[#allocation5 + $0x138] sm:$0xf]
    %v270 = vld [vmem:[#allocation5 + $0x13c] sm:$0xf]
    %v271 = vld [vmem:[#allocation5 + $0x140] sm:$0xf]
    %v272 = vld [vmem:[#allocation5 + $0x144] sm:$0xf]
    %v273 = vld [vmem:[#allocation5 + $0x148] sm:$0xf]
    %v274 = vld [vmem:[#allocation5 + $0x14c] sm:$0xf]
    %v275 = vld [vmem:[#allocation5 + $0x150] sm:$0xf]
    %v276 = vld [vmem:[#allocation5 + $0x154] sm:$0xf]
    %v277 = vld [vmem:[#allocation5 + $0x158] sm:$0xf]
    %v278 = vld [vmem:[#allocation5 + $0x15c] sm:$0xf]
    %v279 = vld [vmem:[#allocation5 + $0x160] sm:$0xf]
    %v280 = vld [vmem:[#allocation5 + $0x164] sm:$0xf]
    %v281 = vld [vmem:[#allocation5 + $0x168] sm:$0xf]
    %v282 = vld [vmem:[#allocation5 + $0x16c] sm:$0xf]
    %v283 = vld [vmem:[#allocation5 + $0x170] sm:$0xf]
    %v284 = vld [vmem:[#allocation5 + $0x174] sm:$0xf]
    %v285 = vld [vmem:[#allocation5 + $0x178] sm:$0xf]
    %v286 = vld [vmem:[#allocation5 + $0x17c] sm:$0xf]
    %v287 = vld [vmem:[#allocation5 + $0x180] sm:$0xf]
    %v288 = vld [vmem:[#allocation5 + $0x184] sm:$0xf]
    %v289 = vld [vmem:[#allocation5 + $0x188] sm:$0xf]
    %v290 = vld [vmem:[#allocation5 + $0x18c] sm:$0xf]
    %v291 = vld [vmem:[#allocation5 + $0x190] sm:$0xf]
    %v292 = vld [vmem:[#allocation5 + $0x194] sm:$0xf]
    %v293 = vld [vmem:[#allocation5 + $0x198] sm:$0xf]
    %v294 = vld [vmem:[#allocation5 + $0x19c] sm:$0xf]
    %v295 = vld [vmem:[#allocation5 + $0x1a0] sm:$0xf]
    %v296 = vld [vmem:[#allocation5 + $0x1a4] sm:$0xf]
    %v297 = vld [vmem:[#allocation5 + $0x1a8] sm:$0xf]
    %v298 = vld [vmem:[#allocation5 + $0x1ac] sm:$0xf]
    %v299 = vld [vmem:[#allocation5 + $0x1b0] sm:$0xf]
    %v300 = vld [vmem:[#allocation5 + $0x1b4] sm:$0xf]
    %v301 = vld [vmem:[#allocation5 + $0x1b8] sm:$0xf]
    %v302 = vld [vmem:[#allocation5 + $0x1bc] sm:$0xf]
    %v303 = vld [vmem:[%s2] sm:$0x1]
    %v305 = vlaneseq
    %v306 = vshrl.u32 %v305, 7
    %v307 = vsub.s32 0, %v306
    %v308 = vrot.slane %v303, %v307
    %v438 = vunpack.c.l.b16 %v63
    %v439 = vunpack.c.h.b16 %v63
    %v440 = vunpack.c.l.b16 %v64
    %v441 = vunpack.c.h.b16 %v64
    %v442 = vunpack.c.l.b16 %v65
    %v443 = vunpack.c.h.b16 %v65
    %v444 = vunpack.c.l.b16 %v66
    %v445 = vunpack.c.l.b16 %v67
    %v446 = vunpack.c.h.b16 %v67
    %v447 = vunpack.c.l.b16 %v68
    %v448 = vunpack.c.h.b16 %v68
    %v449 = vunpack.c.l.b16 %v69
    %v450 = vunpack.c.h.b16 %v69
    %v451 = vunpack.c.l.b16 %v70
    %v452 = vunpack.c.l.b16 %v71
    %v453 = vunpack.c.h.b16 %v71
    %v454 = vunpack.c.l.b16 %v72
    %v455 = vunpack.c.h.b16 %v72
    %v456 = vunpack.c.l.b16 %v73
    %v457 = vunpack.c.h.b16 %v73
    %v458 = vunpack.c.l.b16 %v74
    %v459 = vunpack.c.l.b16 %v75
    %v460 = vunpack.c.h.b16 %v75
    %v461 = vunpack.c.l.b16 %v76
    %v462 = vunpack.c.h.b16 %v76
    %v463 = vunpack.c.l.b16 %v77
    %v464 = vunpack.c.h.b16 %v77
    %v465 = vunpack.c.l.b16 %v78
    %v466 = vunpack.c.l.b16 %v79
    %v467 = vunpack.c.h.b16 %v79
    %v468 = vunpack.c.l.b16 %v80
    %v469 = vunpack.c.h.b16 %v80
    %v470 = vunpack.c.l.b16 %v81
    %v471 = vunpack.c.h.b16 %v81
    %v472 = vunpack.c.l.b16 %v82
    %v473 = vunpack.c.l.b16 %v83
    %v474 = vunpack.c.h.b16 %v83
    %v475 = vunpack.c.l.b16 %v84
    %v476 = vunpack.c.h.b16 %v84
    %v477 = vunpack.c.l.b16 %v85
    %v478 = vunpack.c.h.b16 %v85
    %v479 = vunpack.c.l.b16 %v86
    %v480 = vunpack.c.l.b16 %v87
    %v481 = vunpack.c.h.b16 %v87
    %v482 = vunpack.c.l.b16 %v88
    %v483 = vunpack.c.h.b16 %v88
    %v484 = vunpack.c.l.b16 %v89
    %v485 = vunpack.c.h.b16 %v89
    %v486 = vunpack.c.l.b16 %v90
    %v487 = vunpack.c.l.b16 %v91
    %v488 = vunpack.c.h.b16 %v91
    %v489 = vunpack.c.l.b16 %v92
    %v490 = vunpack.c.h.b16 %v92
    %v491 = vunpack.c.l.b16 %v93
    %v492 = vunpack.c.h.b16 %v93
    %v493 = vunpack.c.l.b16 %v94
    %v494 = vunpack.c.l.b16 %v95
    %v495 = vunpack.c.h.b16 %v95
    %v496 = vunpack.c.l.b16 %v96
    %v497 = vunpack.c.h.b16 %v96
    %v498 = vunpack.c.l.b16 %v97
    %v499 = vunpack.c.h.b16 %v97
    %v500 = vunpack.c.l.b16 %v98
    %v501 = vunpack.c.l.b16 %v99
    %v502 = vunpack.c.h.b16 %v99
    %v503 = vunpack.c.l.b16 %v100
    %v504 = vunpack.c.h.b16 %v100
    %v505 = vunpack.c.l.b16 %v101
    %v506 = vunpack.c.h.b16 %v101
    %v507 = vunpack.c.l.b16 %v102
    %v508 = vunpack.c.l.b16 %v103
    %v509 = vunpack.c.h.b16 %v103
    %v510 = vunpack.c.l.b16 %v104
    %v511 = vunpack.c.h.b16 %v104
    %v512 = vunpack.c.l.b16 %v105
    %v513 = vunpack.c.h.b16 %v105
    %v514 = vunpack.c.l.b16 %v106
    %v515 = vunpack.c.l.b16 %v107
    %v516 = vunpack.c.h.b16 %v107
    %v517 = vunpack.c.l.b16 %v108
    %v518 = vunpack.c.h.b16 %v108
    %v519 = vunpack.c.l.b16 %v109
    %v520 = vunpack.c.h.b16 %v109
    %v521 = vunpack.c.l.b16 %v110
    %v522 = vunpack.c.l.b16 %v111
    %v523 = vunpack.c.h.b16 %v111
    %v524 = vunpack.c.l.b16 %v112
    %v525 = vunpack.c.h.b16 %v112
    %v526 = vunpack.c.l.b16 %v113
    %v527 = vunpack.c.h.b16 %v113
    %v528 = vunpack.c.l.b16 %v114
    %v529 = vunpack.c.l.b16 %v115
    %v530 = vunpack.c.h.b16 %v115
    %v531 = vunpack.c.l.b16 %v116
    %v532 = vunpack.c.h.b16 %v116
    %v533 = vunpack.c.l.b16 %v117
    %v534 = vunpack.c.h.b16 %v117
    %v535 = vunpack.c.l.b16 %v118
    %v536 = vunpack.c.l.b16 %v119
    %v537 = vunpack.c.h.b16 %v119
    %v538 = vunpack.c.l.b16 %v120
    %v539 = vunpack.c.h.b16 %v120
    %v540 = vunpack.c.l.b16 %v121
    %v541 = vunpack.c.h.b16 %v121
    %v542 = vunpack.c.l.b16 %v122
    %v543 = vunpack.c.l.b16 %v123
    %v544 = vunpack.c.h.b16 %v123
    %v545 = vunpack.c.l.b16 %v124
    %v546 = vunpack.c.h.b16 %v124
    %v547 = vunpack.c.l.b16 %v125
    %v548 = vunpack.c.h.b16 %v125
    %v549 = vunpack.c.l.b16 %v126
    %v550 = vunpack.c.l.b16 %v127
    %v551 = vunpack.c.h.b16 %v127
    %v552 = vunpack.c.l.b16 %v128
    %v553 = vunpack.c.h.b16 %v128
    %v554 = vunpack.c.l.b16 %v129
    %v555 = vunpack.c.h.b16 %v129
    %v556 = vunpack.c.l.b16 %v130
    %v557 = vunpack.c.l.b16 %v131
    %v558 = vunpack.c.h.b16 %v131
    %v559 = vunpack.c.l.b16 %v132
    %v560 = vunpack.c.h.b16 %v132
    %v561 = vunpack.c.l.b16 %v133
    %v562 = vunpack.c.h.b16 %v133
    %v563 = vunpack.c.l.b16 %v134
    %v564 = vunpack.c.l.b16 %v135
    %v565 = vunpack.c.h.b16 %v135
    %v566 = vunpack.c.l.b16 %v136
    %v567 = vunpack.c.h.b16 %v136
    %v568 = vunpack.c.l.b16 %v137
    %v569 = vunpack.c.h.b16 %v137
    %v570 = vunpack.c.l.b16 %v138
    %v571 = vunpack.c.l.b16 %v139
    %v572 = vunpack.c.h.b16 %v139
    %v573 = vunpack.c.l.b16 %v140
    %v574 = vunpack.c.h.b16 %v140
    %v575 = vunpack.c.l.b16 %v141
    %v576 = vunpack.c.h.b16 %v141
    %v577 = vunpack.c.l.b16 %v142
    %v578 = vunpack.c.l.b16 %v143
    %v579 = vunpack.c.h.b16 %v143
    %v580 = vunpack.c.l.b16 %v144
    %v581 = vunpack.c.h.b16 %v144
    %v582 = vunpack.c.l.b16 %v145
    %v583 = vunpack.c.h.b16 %v145
    %v584 = vunpack.c.l.b16 %v146
    %v585 = vunpack.c.l.b16 %v147
    %v586 = vunpack.c.h.b16 %v147
    %v587 = vunpack.c.l.b16 %v148
    %v588 = vunpack.c.h.b16 %v148
    %v589 = vunpack.c.l.b16 %v149
    %v590 = vunpack.c.h.b16 %v149
    %v591 = vunpack.c.l.b16 %v150
    %v592 = vunpack.c.l.b16 %v151
    %v593 = vunpack.c.h.b16 %v151
    %v594 = vunpack.c.l.b16 %v152
    %v595 = vunpack.c.h.b16 %v152
    %v596 = vunpack.c.l.b16 %v153
    %v597 = vunpack.c.h.b16 %v153
    %v598 = vunpack.c.l.b16 %v154
    %v599 = vunpack.c.l.b16 %v155
    %v600 = vunpack.c.h.b16 %v155
    %v601 = vunpack.c.l.b16 %v156
    %v602 = vunpack.c.h.b16 %v156
    %v603 = vunpack.c.l.b16 %v157
    %v604 = vunpack.c.h.b16 %v157
    %v605 = vunpack.c.l.b16 %v158
    %v606 = vunpack.c.l.b16 %v159
    %v607 = vunpack.c.h.b16 %v159
    %v608 = vunpack.c.l.b16 %v160
    %v609 = vunpack.c.h.b16 %v160
    %v610 = vunpack.c.l.b16 %v161
    %v611 = vunpack.c.h.b16 %v161
    %v612 = vunpack.c.l.b16 %v162
    %v613 = vunpack.c.l.b16 %v163
    %v614 = vunpack.c.h.b16 %v163
    %v615 = vunpack.c.l.b16 %v164
    %v616 = vunpack.c.h.b16 %v164
    %v617 = vunpack.c.l.b16 %v165
    %v618 = vunpack.c.h.b16 %v165
    %v619 = vunpack.c.l.b16 %v166
    %v620 = vunpack.c.l.b16 %v167
    %v621 = vunpack.c.h.b16 %v167
    %v622 = vunpack.c.l.b16 %v168
    %v623 = vunpack.c.h.b16 %v168
    %v624 = vunpack.c.l.b16 %v169
    %v625 = vunpack.c.h.b16 %v169
    %v626 = vunpack.c.l.b16 %v170
    %v627 = vunpack.c.l.b16 %v171
    %v628 = vunpack.c.h.b16 %v171
    %v629 = vunpack.c.l.b16 %v172
    %v630 = vunpack.c.h.b16 %v172
    %v631 = vunpack.c.l.b16 %v173
    %v632 = vunpack.c.h.b16 %v173
    %v633 = vunpack.c.l.b16 %v174
    %v634 = vunpack.c.l.b16 %v175
    %v635 = vunpack.c.h.b16 %v175
    %v636 = vunpack.c.l.b16 %v176
    %v637 = vunpack.c.h.b16 %v176
    %v638 = vunpack.c.l.b16 %v177
    %v639 = vunpack.c.h.b16 %v177
    %v640 = vunpack.c.l.b16 %v178
    %v641 = vunpack.c.l.b16 %v179
    %v642 = vunpack.c.h.b16 %v179
    %v643 = vunpack.c.l.b16 %v180
    %v644 = vunpack.c.h.b16 %v180
    %v645 = vunpack.c.l.b16 %v181
    %v646 = vunpack.c.h.b16 %v181
    %v647 = vunpack.c.l.b16 %v182
    %v648 = vunpack.c.l.b16 %v183
    %v649 = vunpack.c.h.b16 %v183
    %v650 = vunpack.c.l.b16 %v184
    %v651 = vunpack.c.h.b16 %v184
    %v652 = vunpack.c.l.b16 %v185
    %v653 = vunpack.c.h.b16 %v185
    %v654 = vunpack.c.l.b16 %v186
    %v655 = vunpack.c.l.b16 %v187
    %v656 = vunpack.c.h.b16 %v187
    %v657 = vunpack.c.l.b16 %v188
    %v658 = vunpack.c.h.b16 %v188
    %v659 = vunpack.c.l.b16 %v189
    %v660 = vunpack.c.h.b16 %v189
    %v661 = vunpack.c.l.b16 %v190
    %v662 = vpack.c.b16 %v445, %v438
    %v663 = vpack.c.b16 %v446, %v439
    %v664 = vpack.c.b16 %v447, %v440
    %v665 = vpack.c.b16 %v448, %v441
    %v666 = vpack.c.b16 %v449, %v442
    %v667 = vpack.c.b16 %v450, %v443
    %v668 = vpack.c.b16 %v451, %v444
    %v669 = vpack.c.b16 %v459, %v452
    %v670 = vpack.c.b16 %v460, %v453
    %v671 = vpack.c.b16 %v461, %v454
    %v672 = vpack.c.b16 %v462, %v455
    %v673 = vpack.c.b16 %v463, %v456
    %v674 = vpack.c.b16 %v464, %v457
    %v675 = vpack.c.b16 %v465, %v458
    %v676 = vpack.c.b16 %v473, %v466
    %v677 = vpack.c.b16 %v474, %v467
    %v678 = vpack.c.b16 %v475, %v468
    %v679 = vpack.c.b16 %v476, %v469
    %v680 = vpack.c.b16 %v477, %v470
    %v681 = vpack.c.b16 %v478, %v471
    %v682 = vpack.c.b16 %v479, %v472
    %v683 = vpack.c.b16 %v487, %v480
    %v684 = vpack.c.b16 %v488, %v481
    %v685 = vpack.c.b16 %v489, %v482
    %v686 = vpack.c.b16 %v490, %v483
    %v687 = vpack.c.b16 %v491, %v484
    %v688 = vpack.c.b16 %v492, %v485
    %v689 = vpack.c.b16 %v493, %v486
    %v690 = vpack.c.b16 %v501, %v494
    %v691 = vpack.c.b16 %v502, %v495
    %v692 = vpack.c.b16 %v503, %v496
    %v693 = vpack.c.b16 %v504, %v497
    %v694 = vpack.c.b16 %v505, %v498
    %v695 = vpack.c.b16 %v506, %v499
    %v696 = vpack.c.b16 %v507, %v500
    %v697 = vpack.c.b16 %v515, %v508
    %v698 = vpack.c.b16 %v516, %v509
    %v699 = vpack.c.b16 %v517, %v510
    %v700 = vpack.c.b16 %v518, %v511
    %v701 = vpack.c.b16 %v519, %v512
    %v702 = vpack.c.b16 %v520, %v513
    %v703 = vpack.c.b16 %v521, %v514
    %v704 = vpack.c.b16 %v529, %v522
    %v705 = vpack.c.b16 %v530, %v523
    %v706 = vpack.c.b16 %v531, %v524
    %v707 = vpack.c.b16 %v532, %v525
    %v708 = vpack.c.b16 %v533, %v526
    %v709 = vpack.c.b16 %v534, %v527
    %v710 = vpack.c.b16 %v535, %v528
    %v711 = vpack.c.b16 %v543, %v536
    %v712 = vpack.c.b16 %v544, %v537
    %v713 = vpack.c.b16 %v545, %v538
    %v714 = vpack.c.b16 %v546, %v539
    %v715 = vpack.c.b16 %v547, %v540
    %v716 = vpack.c.b16 %v548, %v541
    %v717 = vpack.c.b16 %v549, %v542
    %v718 = vpack.c.b16 %v557, %v550
    %v719 = vpack.c.b16 %v558, %v551
    %v720 = vpack.c.b16 %v559, %v552
    %v721 = vpack.c.b16 %v560, %v553
    %v722 = vpack.c.b16 %v561, %v554
    %v723 = vpack.c.b16 %v562, %v555
    %v724 = vpack.c.b16 %v563, %v556
    %v725 = vpack.c.b16 %v571, %v564
    %v726 = vpack.c.b16 %v572, %v565
    %v727 = vpack.c.b16 %v573, %v566
    %v728 = vpack.c.b16 %v574, %v567
    %v729 = vpack.c.b16 %v575, %v568
    %v730 = vpack.c.b16 %v576, %v569
    %v731 = vpack.c.b16 %v577, %v570
    %v732 = vpack.c.b16 %v585, %v578
    %v733 = vpack.c.b16 %v586, %v579
    %v734 = vpack.c.b16 %v587, %v580
    %v735 = vpack.c.b16 %v588, %v581
    %v736 = vpack.c.b16 %v589, %v582
    %v737 = vpack.c.b16 %v590, %v583
    %v738 = vpack.c.b16 %v591, %v584
    %v739 = vpack.c.b16 %v599, %v592
    %v740 = vpack.c.b16 %v600, %v593
    %v741 = vpack.c.b16 %v601, %v594
    %v742 = vpack.c.b16 %v602, %v595
    %v743 = vpack.c.b16 %v603, %v596
    %v744 = vpack.c.b16 %v604, %v597
    %v745 = vpack.c.b16 %v605, %v598
    %v746 = vpack.c.b16 %v613, %v606
    %v747 = vpack.c.b16 %v614, %v607
    %v748 = vpack.c.b16 %v615, %v608
    %v749 = vpack.c.b16 %v616, %v609
    %v750 = vpack.c.b16 %v617, %v610
    %v751 = vpack.c.b16 %v618, %v611
    %v752 = vpack.c.b16 %v619, %v612
    %v753 = vpack.c.b16 %v627, %v620
    %v754 = vpack.c.b16 %v628, %v621
    %v755 = vpack.c.b16 %v629, %v622
    %v756 = vpack.c.b16 %v630, %v623
    %v757 = vpack.c.b16 %v631, %v624
    %v758 = vpack.c.b16 %v632, %v625
    %v759 = vpack.c.b16 %v633, %v626
    %v760 = vpack.c.b16 %v641, %v634
    %v761 = vpack.c.b16 %v642, %v635
    %v762 = vpack.c.b16 %v643, %v636
    %v763 = vpack.c.b16 %v644, %v637
    %v764 = vpack.c.b16 %v645, %v638
    %v765 = vpack.c.b16 %v646, %v639
    %v766 = vpack.c.b16 %v647, %v640
    %v767 = vpack.c.b16 %v655, %v648
    %v768 = vpack.c.b16 %v656, %v649
    %v769 = vpack.c.b16 %v657, %v650
    %v770 = vpack.c.b16 %v658, %v651
    %v771 = vpack.c.b16 %v659, %v652
    %v772 = vpack.c.b16 %v660, %v653
    %v773 = vpack.c.b16 %v661, %v654
    %v998 = vunpack.c.l.b16 %v191
    %v999 = vunpack.c.l.b16 %v192
    %v1000 = vunpack.c.l.b16 %v193
    %v1001 = vunpack.c.l.b16 %v194
    %v1002 = vunpack.c.l.b16 %v195
    %v1003 = vunpack.c.l.b16 %v196
    %v1004 = vunpack.c.l.b16 %v197
    %v1005 = vunpack.c.l.b16 %v198
    %v1006 = vunpack.c.l.b16 %v199
    %v1007 = vunpack.c.l.b16 %v200
    %v1008 = vunpack.c.l.b16 %v201
    %v1009 = vunpack.c.l.b16 %v202
    %v1010 = vunpack.c.l.b16 %v203
    %v1011 = vunpack.c.l.b16 %v204
    %v1012 = vunpack.c.l.b16 %v205
    %v1013 = vunpack.c.l.b16 %v206
    %v1014 = vunpack.c.l.b16 %v207
    %v1015 = vunpack.c.l.b16 %v208
    %v1016 = vunpack.c.l.b16 %v209
    %v1017 = vunpack.c.l.b16 %v210
    %v1018 = vunpack.c.l.b16 %v211
    %v1019 = vunpack.c.l.b16 %v212
    %v1020 = vunpack.c.l.b16 %v213
    %v1021 = vunpack.c.l.b16 %v214
    %v1022 = vunpack.c.l.b16 %v215
    %v1023 = vunpack.c.l.b16 %v216
    %v1024 = vunpack.c.l.b16 %v217
    %v1025 = vunpack.c.l.b16 %v218
    %v1026 = vunpack.c.l.b16 %v219
    %v1027 = vunpack.c.l.b16 %v220
    %v1028 = vunpack.c.l.b16 %v221
    %v1029 = vunpack.c.l.b16 %v222
    %v1030 = vunpack.c.l.b16 %v223
    %v1031 = vunpack.c.l.b16 %v224
    %v1032 = vunpack.c.l.b16 %v225
    %v1033 = vunpack.c.l.b16 %v226
    %v1034 = vunpack.c.l.b16 %v227
    %v1035 = vunpack.c.l.b16 %v228
    %v1036 = vunpack.c.l.b16 %v229
    %v1037 = vunpack.c.l.b16 %v230
    %v1038 = vunpack.c.l.b16 %v231
    %v1039 = vunpack.c.l.b16 %v232
    %v1040 = vunpack.c.l.b16 %v233
    %v1041 = vunpack.c.l.b16 %v234
    %v1042 = vunpack.c.l.b16 %v235
    %v1043 = vunpack.c.l.b16 %v236
    %v1044 = vunpack.c.l.b16 %v237
    %v1045 = vunpack.c.l.b16 %v238
    %v1046 = vunpack.c.l.b16 %v239
    %v1047 = vunpack.c.l.b16 %v240
    %v1048 = vunpack.c.l.b16 %v241
    %v1049 = vunpack.c.l.b16 %v242
    %v1050 = vunpack.c.l.b16 %v243
    %v1051 = vunpack.c.l.b16 %v244
    %v1052 = vunpack.c.l.b16 %v245
    %v1053 = vunpack.c.l.b16 %v246
    %v1054 = vunpack.c.l.b16 %v247
    %v1055 = vunpack.c.l.b16 %v248
    %v1056 = vunpack.c.l.b16 %v249
    %v1057 = vunpack.c.l.b16 %v250
    %v1058 = vunpack.c.l.b16 %v251
    %v1059 = vunpack.c.l.b16 %v252
    %v1060 = vunpack.c.l.b16 %v253
    %v1061 = vunpack.c.l.b16 %v254
    %v1062 = vunpack.c.l.b16 %v255
    %v1063 = vunpack.c.l.b16 %v256
    %v1064 = vunpack.c.l.b16 %v257
    %v1065 = vunpack.c.l.b16 %v258
    %v1066 = vunpack.c.l.b16 %v259
    %v1067 = vunpack.c.l.b16 %v260
    %v1068 = vunpack.c.l.b16 %v261
    %v1069 = vunpack.c.l.b16 %v262
    %v1070 = vunpack.c.l.b16 %v263
    %v1071 = vunpack.c.l.b16 %v264
    %v1072 = vunpack.c.l.b16 %v265
    %v1073 = vunpack.c.l.b16 %v266
    %v1074 = vunpack.c.l.b16 %v267
    %v1075 = vunpack.c.l.b16 %v268
    %v1076 = vunpack.c.l.b16 %v269
    %v1077 = vunpack.c.l.b16 %v270
    %v1078 = vunpack.c.l.b16 %v271
    %v1079 = vunpack.c.l.b16 %v272
    %v1080 = vunpack.c.l.b16 %v273
    %v1081 = vunpack.c.l.b16 %v274
    %v1082 = vunpack.c.l.b16 %v275
    %v1083 = vunpack.c.l.b16 %v276
    %v1084 = vunpack.c.l.b16 %v277
    %v1085 = vunpack.c.l.b16 %v278
    %v1086 = vunpack.c.l.b16 %v279
    %v1087 = vunpack.c.l.b16 %v280
    %v1088 = vunpack.c.l.b16 %v281
    %v1089 = vunpack.c.l.b16 %v282
    %v1090 = vunpack.c.l.b16 %v283
    %v1091 = vunpack.c.l.b16 %v284
    %v1092 = vunpack.c.l.b16 %v285
    %v1093 = vunpack.c.l.b16 %v286
    %v1094 = vunpack.c.l.b16 %v287
    %v1095 = vunpack.c.l.b16 %v288
    %v1096 = vunpack.c.l.b16 %v289
    %v1097 = vunpack.c.l.b16 %v290
    %v1098 = vunpack.c.l.b16 %v291
    %v1099 = vunpack.c.l.b16 %v292
    %v1100 = vunpack.c.l.b16 %v293
    %v1101 = vunpack.c.l.b16 %v294
    %v1102 = vunpack.c.l.b16 %v295
    %v1103 = vunpack.c.l.b16 %v296
    %v1104 = vunpack.c.l.b16 %v297
    %v1105 = vunpack.c.l.b16 %v298
    %v1106 = vunpack.c.l.b16 %v299
    %v1107 = vunpack.c.l.b16 %v300
    %v1108 = vunpack.c.l.b16 %v301
    %v1109 = vunpack.c.l.b16 %v302
    %v1110 = vpack.c.b16 %v999, %v998
    %v1111 = vpack.c.b16 %v1001, %v1000
    %v1112 = vpack.c.b16 %v1003, %v1002
    %v1113 = vpack.c.b16 %v1005, %v1004
    %v1114 = vpack.c.b16 %v1007, %v1006
    %v1115 = vpack.c.b16 %v1009, %v1008
    %v1116 = vpack.c.b16 %v1011, %v1010
    %v1117 = vpack.c.b16 %v1013, %v1012
    %v1118 = vpack.c.b16 %v1015, %v1014
    %v1119 = vpack.c.b16 %v1017, %v1016
    %v1120 = vpack.c.b16 %v1019, %v1018
    %v1121 = vpack.c.b16 %v1021, %v1020
    %v1122 = vpack.c.b16 %v1023, %v1022
    %v1123 = vpack.c.b16 %v1025, %v1024
    %v1124 = vpack.c.b16 %v1027, %v1026
    %v1125 = vpack.c.b16 %v1029, %v1028
    %v1126 = vpack.c.b16 %v1031, %v1030
    %v1127 = vpack.c.b16 %v1033, %v1032
    %v1128 = vpack.c.b16 %v1035, %v1034
    %v1129 = vpack.c.b16 %v1037, %v1036
    %v1130 = vpack.c.b16 %v1039, %v1038
    %v1131 = vpack.c.b16 %v1041, %v1040
    %v1132 = vpack.c.b16 %v1043, %v1042
    %v1133 = vpack.c.b16 %v1045, %v1044
    %v1134 = vpack.c.b16 %v1047, %v1046
    %v1135 = vpack.c.b16 %v1049, %v1048
    %v1136 = vpack.c.b16 %v1051, %v1050
    %v1137 = vpack.c.b16 %v1053, %v1052
    %v1138 = vpack.c.b16 %v1055, %v1054
    %v1139 = vpack.c.b16 %v1057, %v1056
    %v1140 = vpack.c.b16 %v1059, %v1058
    %v1141 = vpack.c.b16 %v1061, %v1060
    %v1142 = vpack.c.b16 %v1063, %v1062
    %v1143 = vpack.c.b16 %v1065, %v1064
    %v1144 = vpack.c.b16 %v1067, %v1066
    %v1145 = vpack.c.b16 %v1069, %v1068
    %v1146 = vpack.c.b16 %v1071, %v1070
    %v1147 = vpack.c.b16 %v1073, %v1072
    %v1148 = vpack.c.b16 %v1075, %v1074
    %v1149 = vpack.c.b16 %v1077, %v1076
    %v1150 = vpack.c.b16 %v1079, %v1078
    %v1151 = vpack.c.b16 %v1081, %v1080
    %v1152 = vpack.c.b16 %v1083, %v1082
    %v1153 = vpack.c.b16 %v1085, %v1084
    %v1154 = vpack.c.b16 %v1087, %v1086
    %v1155 = vpack.c.b16 %v1089, %v1088
    %v1156 = vpack.c.b16 %v1091, %v1090
    %v1157 = vpack.c.b16 %v1093, %v1092
    %v1158 = vpack.c.b16 %v1095, %v1094
    %v1159 = vpack.c.b16 %v1097, %v1096
    %v1160 = vpack.c.b16 %v1099, %v1098
    %v1161 = vpack.c.b16 %v1101, %v1100
    %v1162 = vpack.c.b16 %v1103, %v1102
    %v1163 = vpack.c.b16 %v1105, %v1104
    %v1164 = vpack.c.b16 %v1107, %v1106
    %v1165 = vpack.c.b16 %v1109, %v1108
    %1222 = vmatprep.subr.bf16.mxu0 0
    %1223 = vmatpush1.bf16.msra.mxu0 %v1117
    %1224 = vmatprep.subr.bf16.mxu0 0
    %1225 = vmatpush1.bf16.msra.mxu0 %v1116
    %1226 = vmatprep.subr.bf16.mxu0 0
    %1227 = vmatpush1.bf16.msra.mxu0 %v1115
    %1228 = vmatprep.subr.bf16.mxu0 0
    %1229 = vmatpush1.bf16.msra.mxu0 %v1114
    %1230 = vmatprep.subr.bf16.mxu0 0
    %1231 = vmatpush1.bf16.msra.mxu0 %v1113
    %1232 = vmatprep.subr.bf16.mxu0 0
    %1233 = vmatpush1.bf16.msra.mxu0 %v1112
    %1234 = vmatprep.subr.bf16.mxu0 0
    %1235 = vmatpush1.bf16.msra.mxu0 %v1111
    %1236 = vmatprep.subr.bf16.mxu0 0
    %1237 = vmatpush1.bf16.msra.mxu0 %v1110
    %1238 = vmatprep.subr.bf16.mxu0 0
    %1239 = vmatpush2.bf16.msra.mxu0 %v1125
    %1240 = vmatprep.subr.bf16.mxu0 0
    %1241 = vmatpush2.bf16.msra.mxu0 %v1124
    %1242 = vmatprep.subr.bf16.mxu0 0
    %1243 = vmatpush2.bf16.msra.mxu0 %v1123
    %1244 = vmatprep.subr.bf16.mxu0 0
    %1245 = vmatpush2.bf16.msra.mxu0 %v1122
    %1246 = vmatprep.subr.bf16.mxu0 0
    %1247 = vmatpush2.bf16.msra.mxu0 %v1121
    %1248 = vmatprep.subr.bf16.mxu0 0
    %1249 = vmatpush2.bf16.msra.mxu0 %v1120
    %1250 = vmatprep.subr.bf16.mxu0 0
    %1251 = vmatpush2.bf16.msra.mxu0 %v1119
    %1252 = vmatprep.subr.bf16.mxu0 0
    %1253 = vmatpush2.bf16.msra.mxu0 %v1118
    %1254 = vmatprep.mubr.bf16.mxu0 %v663
    %1255 = vmatmul.mubr.bf16.gmra.mxu0 %v662
    %v1256 = vpop.f32.mrf.mxu0
    %v1257 = vadd.f32 %v308, %v1256
    %v1258 = vpop.f32.mrf.mxu0
    %v1259 = vpop.f32.mrf.mxu0
    %v1260 = vadd.f32 %v308, %v1259
    %v1261 = vpop.f32.mrf.mxu0
    %1262 = vmatprep.mubr.bf16.mxu0 %v670
    %1263 = vmatmul.mubr.bf16.gmra.mxu0 %v669
    %v1264 = vpop.f32.mrf.mxu0
    %v1265 = vadd.f32 %v308, %v1264
    %v1266 = vpop.f32.mrf.mxu0
    %v1267 = vpop.f32.mrf.mxu0
    %v1268 = vadd.f32 %v308, %v1267
    %v1269 = vpop.f32.mrf.mxu0
    %1270 = vmatprep.mubr.bf16.mxu0 %v677
    %1271 = vmatmul.mubr.bf16.gmra.mxu0 %v676
    %v1272 = vpop.f32.mrf.mxu0
    %v1273 = vadd.f32 %v308, %v1272
    %v1274 = vpop.f32.mrf.mxu0
    %v1275 = vpop.f32.mrf.mxu0
    %v1276 = vadd.f32 %v308, %v1275
    %v1277 = vpop.f32.mrf.mxu0
    %1278 = vmatprep.mubr.bf16.mxu0 %v684
    %1279 = vmatmul.mubr.bf16.gmra.mxu0 %v683
    %v1280 = vpop.f32.mrf.mxu0
    %v1281 = vadd.f32 %v308, %v1280
    %v1282 = vpop.f32.mrf.mxu0
    %v1283 = vpop.f32.mrf.mxu0
    %v1284 = vadd.f32 %v308, %v1283
    %v1285 = vpop.f32.mrf.mxu0
    %1286 = vmatprep.mubr.bf16.mxu0 %v691
    %1287 = vmatmul.mubr.bf16.gmra.mxu0 %v690
    %v1288 = vpop.f32.mrf.mxu0
    %v1289 = vadd.f32 %v308, %v1288
    %v1290 = vpop.f32.mrf.mxu0
    %v1291 = vpop.f32.mrf.mxu0
    %v1292 = vadd.f32 %v308, %v1291
    %v1293 = vpop.f32.mrf.mxu0
    %1294 = vmatprep.mubr.bf16.mxu0 %v698
    %1295 = vmatmul.mubr.bf16.gmra.mxu0 %v697
    %v1296 = vpop.f32.mrf.mxu0
    %v1297 = vadd.f32 %v308, %v1296
    %v1298 = vpop.f32.mrf.mxu0
    %v1299 = vpop.f32.mrf.mxu0
    %v1300 = vadd.f32 %v308, %v1299
    %v1301 = vpop.f32.mrf.mxu0
    %1302 = vmatprep.mubr.bf16.mxu0 %v705
    %1303 = vmatmul.mubr.bf16.gmra.mxu0 %v704
    %v1304 = vpop.f32.mrf.mxu0
    %v1305 = vadd.f32 %v308, %v1304
    %v1306 = vpop.f32.mrf.mxu0
    %v1307 = vpop.f32.mrf.mxu0
    %v1308 = vadd.f32 %v308, %v1307
    %v1309 = vpop.f32.mrf.mxu0
    %1310 = vmatprep.mubr.bf16.mxu0 %v712
    %1311 = vmatmul.mubr.bf16.gmra.mxu0 %v711
    %v1312 = vpop.f32.mrf.mxu0
    %v1313 = vadd.f32 %v308, %v1312
    %v1314 = vpop.f32.mrf.mxu0
    %v1315 = vpop.f32.mrf.mxu0
    %v1316 = vadd.f32 %v308, %v1315
    %v1317 = vpop.f32.mrf.mxu0
    %1318 = vmatprep.mubr.bf16.mxu0 %v719
    %1319 = vmatmul.mubr.bf16.gmra.mxu0 %v718
    %v1320 = vpop.f32.mrf.mxu0
    %v1321 = vadd.f32 %v308, %v1320
    %v1322 = vpop.f32.mrf.mxu0
    %v1323 = vpop.f32.mrf.mxu0
    %v1324 = vadd.f32 %v308, %v1323
    %v1325 = vpop.f32.mrf.mxu0
    %1326 = vmatprep.mubr.bf16.mxu0 %v726
    %1327 = vmatmul.mubr.bf16.gmra.mxu0 %v725
    %v1328 = vpop.f32.mrf.mxu0
    %v1329 = vadd.f32 %v308, %v1328
    %v1330 = vpop.f32.mrf.mxu0
    %v1331 = vpop.f32.mrf.mxu0
    %v1332 = vadd.f32 %v308, %v1331
    %v1333 = vpop.f32.mrf.mxu0
    %1334 = vmatprep.mubr.bf16.mxu0 %v733
    %1335 = vmatmul.mubr.bf16.gmra.mxu0 %v732
    %v1336 = vpop.f32.mrf.mxu0
    %v1337 = vadd.f32 %v308, %v1336
    %v1338 = vpop.f32.mrf.mxu0
    %v1339 = vpop.f32.mrf.mxu0
    %v1340 = vadd.f32 %v308, %v1339
    %v1341 = vpop.f32.mrf.mxu0
    %1342 = vmatprep.mubr.bf16.mxu0 %v740
    %1343 = vmatmul.mubr.bf16.gmra.mxu0 %v739
    %v1344 = vpop.f32.mrf.mxu0
    %v1345 = vadd.f32 %v308, %v1344
    %v1346 = vpop.f32.mrf.mxu0
    %v1347 = vpop.f32.mrf.mxu0
    %v1348 = vadd.f32 %v308, %v1347
    %v1349 = vpop.f32.mrf.mxu0
    %1350 = vmatprep.mubr.bf16.mxu0 %v747
    %1351 = vmatmul.mubr.bf16.gmra.mxu0 %v746
    %v1352 = vpop.f32.mrf.mxu0
    %v1353 = vadd.f32 %v308, %v1352
    %v1354 = vpop.f32.mrf.mxu0
    %v1355 = vpop.f32.mrf.mxu0
    %v1356 = vadd.f32 %v308, %v1355
    %v1357 = vpop.f32.mrf.mxu0
    %1358 = vmatprep.mubr.bf16.mxu0 %v754
    %1359 = vmatmul.mubr.bf16.gmra.mxu0 %v753
    %v1360 = vpop.f32.mrf.mxu0
    %v1361 = vadd.f32 %v308, %v1360
    %v1362 = vpop.f32.mrf.mxu0
    %v1363 = vpop.f32.mrf.mxu0
    %v1364 = vadd.f32 %v308, %v1363
    %v1365 = vpop.f32.mrf.mxu0
    %1366 = vmatprep.mubr.bf16.mxu0 %v761
    %1367 = vmatmul.mubr.bf16.gmra.mxu0 %v760
    %v1368 = vpop.f32.mrf.mxu0
    %v1369 = vadd.f32 %v308, %v1368
    %v1370 = vpop.f32.mrf.mxu0
    %v1371 = vpop.f32.mrf.mxu0
    %v1372 = vadd.f32 %v308, %v1371
    %v1373 = vpop.f32.mrf.mxu0
    %1374 = vmatprep.mubr.bf16.mxu0 %v768
    %1375 = vmatmul.mubr.bf16.gmra.mxu0 %v767
    %v1376 = vpop.f32.mrf.mxu0
    %v1377 = vadd.f32 %v308, %v1376
    %v1378 = vpop.f32.mrf.mxu0
    %v1379 = vpop.f32.mrf.mxu0
    %v1380 = vadd.f32 %v308, %v1379
    %v1381 = vpop.f32.mrf.mxu0
    %1382 = vdwg.mxu0
    %1383 = vmatprep.subr.bf16.mxu0 0
    %1384 = vmatpush1.bf16.msra.mxu0 %v1133
    %1385 = vmatprep.subr.bf16.mxu0 0
    %1386 = vmatpush1.bf16.msra.mxu0 %v1132
    %1387 = vmatprep.subr.bf16.mxu0 0
    %1388 = vmatpush1.bf16.msra.mxu0 %v1131
    %1389 = vmatprep.subr.bf16.mxu0 0
    %1390 = vmatpush1.bf16.msra.mxu0 %v1130
    %1391 = vmatprep.subr.bf16.mxu0 0
    %1392 = vmatpush1.bf16.msra.mxu0 %v1129
    %1393 = vmatprep.subr.bf16.mxu0 0
    %1394 = vmatpush1.bf16.msra.mxu0 %v1128
    %1395 = vmatprep.subr.bf16.mxu0 0
    %1396 = vmatpush1.bf16.msra.mxu0 %v1127
    %1397 = vmatprep.subr.bf16.mxu0 0
    %1398 = vmatpush1.bf16.msra.mxu0 %v1126
    %1399 = vmatprep.subr.bf16.mxu0 0
    %1400 = vmatpush2.bf16.msra.mxu0 %v1141
    %1401 = vmatprep.subr.bf16.mxu0 0
    %1402 = vmatpush2.bf16.msra.mxu0 %v1140
    %1403 = vmatprep.subr.bf16.mxu0 0
    %1404 = vmatpush2.bf16.msra.mxu0 %v1139
    %1405 = vmatprep.subr.bf16.mxu0 0
    %1406 = vmatpush2.bf16.msra.mxu0 %v1138
    %1407 = vmatprep.subr.bf16.mxu0 0
    %1408 = vmatpush2.bf16.msra.mxu0 %v1137
    %1409 = vmatprep.subr.bf16.mxu0 0
    %1410 = vmatpush2.bf16.msra.mxu0 %v1136
    %1411 = vmatprep.subr.bf16.mxu0 0
    %1412 = vmatpush2.bf16.msra.mxu0 %v1135
    %1413 = vmatprep.subr.bf16.mxu0 0
    %1414 = vmatpush2.bf16.msra.mxu0 %v1134
    %1415 = vmatprep.mubr.bf16.mxu0 %v665
    %1416 = vmatmul.mubr.bf16.gmra.mxu0 %v664
    %v1417 = vpop.f32.mrf.mxu0
    %v1418 = vadd.f32 %v1257, %v1417
    %v1419 = vpop.f32.mrf.mxu0
    %v1420 = vpop.f32.mrf.mxu0
    %v1421 = vadd.f32 %v1260, %v1420
    %v1422 = vpop.f32.mrf.mxu0
    %1423 = vmatprep.mubr.bf16.mxu0 %v672
    %1424 = vmatmul.mubr.bf16.gmra.mxu0 %v671
    %v1425 = vpop.f32.mrf.mxu0
    %v1426 = vadd.f32 %v1265, %v1425
    %v1427 = vpop.f32.mrf.mxu0
    %v1428 = vpop.f32.mrf.mxu0
    %v1429 = vadd.f32 %v1268, %v1428
    %v1430 = vpop.f32.mrf.mxu0
    %1431 = vmatprep.mubr.bf16.mxu0 %v679
    %1432 = vmatmul.mubr.bf16.gmra.mxu0 %v678
    %v1433 = vpop.f32.mrf.mxu0
    %v1434 = vadd.f32 %v1273, %v1433
    %v1435 = vpop.f32.mrf.mxu0
    %v1436 = vpop.f32.mrf.mxu0
    %v1437 = vadd.f32 %v1276, %v1436
    %v1438 = vpop.f32.mrf.mxu0
    %1439 = vmatprep.mubr.bf16.mxu0 %v686
    %1440 = vmatmul.mubr.bf16.gmra.mxu0 %v685
    %v1441 = vpop.f32.mrf.mxu0
    %v1442 = vadd.f32 %v1281, %v1441
    %v1443 = vpop.f32.mrf.mxu0
    %v1444 = vpop.f32.mrf.mxu0
    %v1445 = vadd.f32 %v1284, %v1444
    %v1446 = vpop.f32.mrf.mxu0
    %1447 = vmatprep.mubr.bf16.mxu0 %v693
    %1448 = vmatmul.mubr.bf16.gmra.mxu0 %v692
    %v1449 = vpop.f32.mrf.mxu0
    %v1450 = vadd.f32 %v1289, %v1449
    %v1451 = vpop.f32.mrf.mxu0
    %v1452 = vpop.f32.mrf.mxu0
    %v1453 = vadd.f32 %v1292, %v1452
    %v1454 = vpop.f32.mrf.mxu0
    %1455 = vmatprep.mubr.bf16.mxu0 %v700
    %1456 = vmatmul.mubr.bf16.gmra.mxu0 %v699
    %v1457 = vpop.f32.mrf.mxu0
    %v1458 = vadd.f32 %v1297, %v1457
    %v1459 = vpop.f32.mrf.mxu0
    %v1460 = vpop.f32.mrf.mxu0
    %v1461 = vadd.f32 %v1300, %v1460
    %v1462 = vpop.f32.mrf.mxu0
    %1463 = vmatprep.mubr.bf16.mxu0 %v707
    %1464 = vmatmul.mubr.bf16.gmra.mxu0 %v706
    %v1465 = vpop.f32.mrf.mxu0
    %v1466 = vadd.f32 %v1305, %v1465
    %v1467 = vpop.f32.mrf.mxu0
    %v1468 = vpop.f32.mrf.mxu0
    %v1469 = vadd.f32 %v1308, %v1468
    %v1470 = vpop.f32.mrf.mxu0
    %1471 = vmatprep.mubr.bf16.mxu0 %v714
    %1472 = vmatmul.mubr.bf16.gmra.mxu0 %v713
    %v1473 = vpop.f32.mrf.mxu0
    %v1474 = vadd.f32 %v1313, %v1473
    %v1475 = vpop.f32.mrf.mxu0
    %v1476 = vpop.f32.mrf.mxu0
    %v1477 = vadd.f32 %v1316, %v1476
    %v1478 = vpop.f32.mrf.mxu0
    %1479 = vmatprep.mubr.bf16.mxu0 %v721
    %1480 = vmatmul.mubr.bf16.gmra.mxu0 %v720
    %v1481 = vpop.f32.mrf.mxu0
    %v1482 = vadd.f32 %v1321, %v1481
    %v1483 = vpop.f32.mrf.mxu0
    %v1484 = vpop.f32.mrf.mxu0
    %v1485 = vadd.f32 %v1324, %v1484
    %v1486 = vpop.f32.mrf.mxu0
    %1487 = vmatprep.mubr.bf16.mxu0 %v728
    %1488 = vmatmul.mubr.bf16.gmra.mxu0 %v727
    %v1489 = vpop.f32.mrf.mxu0
    %v1490 = vadd.f32 %v1329, %v1489
    %v1491 = vpop.f32.mrf.mxu0
    %v1492 = vpop.f32.mrf.mxu0
    %v1493 = vadd.f32 %v1332, %v1492
    %v1494 = vpop.f32.mrf.mxu0
    %1495 = vmatprep.mubr.bf16.mxu0 %v735
    %1496 = vmatmul.mubr.bf16.gmra.mxu0 %v734
    %v1497 = vpop.f32.mrf.mxu0
    %v1498 = vadd.f32 %v1337, %v1497
    %v1499 = vpop.f32.mrf.mxu0
    %v1500 = vpop.f32.mrf.mxu0
    %v1501 = vadd.f32 %v1340, %v1500
    %v1502 = vpop.f32.mrf.mxu0
    %1503 = vmatprep.mubr.bf16.mxu0 %v742
    %1504 = vmatmul.mubr.bf16.gmra.mxu0 %v741
    %v1505 = vpop.f32.mrf.mxu0
    %v1506 = vadd.f32 %v1345, %v1505
    %v1507 = vpop.f32.mrf.mxu0
    %v1508 = vpop.f32.mrf.mxu0
    %v1509 = vadd.f32 %v1348, %v1508
    %v1510 = vpop.f32.mrf.mxu0
    %1511 = vmatprep.mubr.bf16.mxu0 %v749
    %1512 = vmatmul.mubr.bf16.gmra.mxu0 %v748
    %v1513 = vpop.f32.mrf.mxu0
    %v1514 = vadd.f32 %v1353, %v1513
    %v1515 = vpop.f32.mrf.mxu0
    %v1516 = vpop.f32.mrf.mxu0
    %v1517 = vadd.f32 %v1356, %v1516
    %v1518 = vpop.f32.mrf.mxu0
    %1519 = vmatprep.mubr.bf16.mxu0 %v756
    %1520 = vmatmul.mubr.bf16.gmra.mxu0 %v755
    %v1521 = vpop.f32.mrf.mxu0
    %v1522 = vadd.f32 %v1361, %v1521
    %v1523 = vpop.f32.mrf.mxu0
    %v1524 = vpop.f32.mrf.mxu0
    %v1525 = vadd.f32 %v1364, %v1524
    %v1526 = vpop.f32.mrf.mxu0
    %1527 = vmatprep.mubr.bf16.mxu0 %v763
    %1528 = vmatmul.mubr.bf16.gmra.mxu0 %v762
    %v1529 = vpop.f32.mrf.mxu0
    %v1530 = vadd.f32 %v1369, %v1529
    %v1531 = vpop.f32.mrf.mxu0
    %v1532 = vpop.f32.mrf.mxu0
    %v1533 = vadd.f32 %v1372, %v1532
    %v1534 = vpop.f32.mrf.mxu0
    %1535 = vmatprep.mubr.bf16.mxu0 %v770
    %1536 = vmatmul.mubr.bf16.gmra.mxu0 %v769
    %v1537 = vpop.f32.mrf.mxu0
    %v1538 = vadd.f32 %v1377, %v1537
    %v1539 = vpop.f32.mrf.mxu0
    %v1540 = vpop.f32.mrf.mxu0
    %v1541 = vadd.f32 %v1380, %v1540
    %v1542 = vpop.f32.mrf.mxu0
    %1543 = vdwg.mxu0
    %1544 = vmatprep.subr.bf16.mxu0 0
    %1545 = vmatpush1.bf16.msra.mxu0 %v1149
    %1546 = vmatprep.subr.bf16.mxu0 0
    %1547 = vmatpush1.bf16.msra.mxu0 %v1148
    %1548 = vmatprep.subr.bf16.mxu0 0
    %1549 = vmatpush1.bf16.msra.mxu0 %v1147
    %1550 = vmatprep.subr.bf16.mxu0 0
    %1551 = vmatpush1.bf16.msra.mxu0 %v1146
    %1552 = vmatprep.subr.bf16.mxu0 0
    %1553 = vmatpush1.bf16.msra.mxu0 %v1145
    %1554 = vmatprep.subr.bf16.mxu0 0
    %1555 = vmatpush1.bf16.msra.mxu0 %v1144
    %1556 = vmatprep.subr.bf16.mxu0 0
    %1557 = vmatpush1.bf16.msra.mxu0 %v1143
    %1558 = vmatprep.subr.bf16.mxu0 0
    %1559 = vmatpush1.bf16.msra.mxu0 %v1142
    %1560 = vmatprep.subr.bf16.mxu0 0
    %1561 = vmatpush2.bf16.msra.mxu0 %v1157
    %1562 = vmatprep.subr.bf16.mxu0 0
    %1563 = vmatpush2.bf16.msra.mxu0 %v1156
    %1564 = vmatprep.subr.bf16.mxu0 0
    %1565 = vmatpush2.bf16.msra.mxu0 %v1155
    %1566 = vmatprep.subr.bf16.mxu0 0
    %1567 = vmatpush2.bf16.msra.mxu0 %v1154
    %1568 = vmatprep.subr.bf16.mxu0 0
    %1569 = vmatpush2.bf16.msra.mxu0 %v1153
    %1570 = vmatprep.subr.bf16.mxu0 0
    %1571 = vmatpush2.bf16.msra.mxu0 %v1152
    %1572 = vmatprep.subr.bf16.mxu0 0
    %1573 = vmatpush2.bf16.msra.mxu0 %v1151
    %1574 = vmatprep.subr.bf16.mxu0 0
    %1575 = vmatpush2.bf16.msra.mxu0 %v1150
    %1576 = vmatprep.mubr.bf16.mxu0 %v667
    %1577 = vmatmul.mubr.bf16.gmra.mxu0 %v666
    %v1578 = vpop.f32.mrf.mxu0
    %v1579 = vadd.f32 %v1418, %v1578
    %v1580 = vpop.f32.mrf.mxu0
    %v1581 = vpop.f32.mrf.mxu0
    %v1582 = vadd.f32 %v1421, %v1581
    %v1583 = vpop.f32.mrf.mxu0
    %1584 = vmatprep.mubr.bf16.mxu0 %v674
    %1585 = vmatmul.mubr.bf16.gmra.mxu0 %v673
    %v1586 = vpop.f32.mrf.mxu0
    %v1587 = vadd.f32 %v1426, %v1586
    %v1588 = vpop.f32.mrf.mxu0
    %v1589 = vpop.f32.mrf.mxu0
    %v1590 = vadd.f32 %v1429, %v1589
    %v1591 = vpop.f32.mrf.mxu0
    %1592 = vmatprep.mubr.bf16.mxu0 %v681
    %1593 = vmatmul.mubr.bf16.gmra.mxu0 %v680
    %v1594 = vpop.f32.mrf.mxu0
    %v1595 = vadd.f32 %v1434, %v1594
    %v1596 = vpop.f32.mrf.mxu0
    %v1597 = vpop.f32.mrf.mxu0
    %v1598 = vadd.f32 %v1437, %v1597
    %v1599 = vpop.f32.mrf.mxu0
    %1600 = vmatprep.mubr.bf16.mxu0 %v688
    %1601 = vmatmul.mubr.bf16.gmra.mxu0 %v687
    %v1602 = vpop.f32.mrf.mxu0
    %v1603 = vadd.f32 %v1442, %v1602
    %v1604 = vpop.f32.mrf.mxu0
    %v1605 = vpop.f32.mrf.mxu0
    %v1606 = vadd.f32 %v1445, %v1605
    %v1607 = vpop.f32.mrf.mxu0
    %1608 = vmatprep.mubr.bf16.mxu0 %v695
    %1609 = vmatmul.mubr.bf16.gmra.mxu0 %v694
    %v1610 = vpop.f32.mrf.mxu0
    %v1611 = vadd.f32 %v1450, %v1610
    %v1612 = vpop.f32.mrf.mxu0
    %v1613 = vpop.f32.mrf.mxu0
    %v1614 = vadd.f32 %v1453, %v1613
    %v1615 = vpop.f32.mrf.mxu0
    %1616 = vmatprep.mubr.bf16.mxu0 %v702
    %1617 = vmatmul.mubr.bf16.gmra.mxu0 %v701
    %v1618 = vpop.f32.mrf.mxu0
    %v1619 = vadd.f32 %v1458, %v1618
    %v1620 = vpop.f32.mrf.mxu0
    %v1621 = vpop.f32.mrf.mxu0
    %v1622 = vadd.f32 %v1461, %v1621
    %v1623 = vpop.f32.mrf.mxu0
    %1624 = vmatprep.mubr.bf16.mxu0 %v709
    %1625 = vmatmul.mubr.bf16.gmra.mxu0 %v708
    %v1626 = vpop.f32.mrf.mxu0
    %v1627 = vadd.f32 %v1466, %v1626
    %v1628 = vpop.f32.mrf.mxu0
    %v1629 = vpop.f32.mrf.mxu0
    %v1630 = vadd.f32 %v1469, %v1629
    %v1631 = vpop.f32.mrf.mxu0
    %1632 = vmatprep.mubr.bf16.mxu0 %v716
    %1633 = vmatmul.mubr.bf16.gmra.mxu0 %v715
    %v1634 = vpop.f32.mrf.mxu0
    %v1635 = vadd.f32 %v1474, %v1634
    %v1636 = vpop.f32.mrf.mxu0
    %v1637 = vpop.f32.mrf.mxu0
    %v1638 = vadd.f32 %v1477, %v1637
    %v1639 = vpop.f32.mrf.mxu0
    %1640 = vmatprep.mubr.bf16.mxu0 %v723
    %1641 = vmatmul.mubr.bf16.gmra.mxu0 %v722
    %v1642 = vpop.f32.mrf.mxu0
    %v1643 = vadd.f32 %v1482, %v1642
    %v1644 = vpop.f32.mrf.mxu0
    %v1645 = vpop.f32.mrf.mxu0
    %v1646 = vadd.f32 %v1485, %v1645
    %v1647 = vpop.f32.mrf.mxu0
    %1648 = vmatprep.mubr.bf16.mxu0 %v730
    %1649 = vmatmul.mubr.bf16.gmra.mxu0 %v729
    %v1650 = vpop.f32.mrf.mxu0
    %v1651 = vadd.f32 %v1490, %v1650
    %v1652 = vpop.f32.mrf.mxu0
    %v1653 = vpop.f32.mrf.mxu0
    %v1654 = vadd.f32 %v1493, %v1653
    %v1655 = vpop.f32.mrf.mxu0
    %1656 = vmatprep.mubr.bf16.mxu0 %v737
    %1657 = vmatmul.mubr.bf16.gmra.mxu0 %v736
    %v1658 = vpop.f32.mrf.mxu0
    %v1659 = vadd.f32 %v1498, %v1658
    %v1660 = vpop.f32.mrf.mxu0
    %v1661 = vpop.f32.mrf.mxu0
    %v1662 = vadd.f32 %v1501, %v1661
    %v1663 = vpop.f32.mrf.mxu0
    %1664 = vmatprep.mubr.bf16.mxu0 %v744
    %1665 = vmatmul.mubr.bf16.gmra.mxu0 %v743
    %v1666 = vpop.f32.mrf.mxu0
    %v1667 = vadd.f32 %v1506, %v1666
    %v1668 = vpop.f32.mrf.mxu0
    %v1669 = vpop.f32.mrf.mxu0
    %v1670 = vadd.f32 %v1509, %v1669
    %v1671 = vpop.f32.mrf.mxu0
    %1672 = vmatprep.mubr.bf16.mxu0 %v751
    %1673 = vmatmul.mubr.bf16.gmra.mxu0 %v750
    %v1674 = vpop.f32.mrf.mxu0
    %v1675 = vadd.f32 %v1514, %v1674
    %v1676 = vpop.f32.mrf.mxu0
    %v1677 = vpop.f32.mrf.mxu0
    %v1678 = vadd.f32 %v1517, %v1677
    %v1679 = vpop.f32.mrf.mxu0
    %1680 = vmatprep.mubr.bf16.mxu0 %v758
    %1681 = vmatmul.mubr.bf16.gmra.mxu0 %v757
    %v1682 = vpop.f32.mrf.mxu0
    %v1683 = vadd.f32 %v1522, %v1682
    %v1684 = vpop.f32.mrf.mxu0
    %v1685 = vpop.f32.mrf.mxu0
    %v1686 = vadd.f32 %v1525, %v1685
    %v1687 = vpop.f32.mrf.mxu0
    %1688 = vmatprep.mubr.bf16.mxu0 %v765
    %1689 = vmatmul.mubr.bf16.gmra.mxu0 %v764
    %v1690 = vpop.f32.mrf.mxu0
    %v1691 = vadd.f32 %v1530, %v1690
    %v1692 = vpop.f32.mrf.mxu0
    %v1693 = vpop.f32.mrf.mxu0
    %v1694 = vadd.f32 %v1533, %v1693
    %v1695 = vpop.f32.mrf.mxu0
    %1696 = vmatprep.mubr.bf16.mxu0 %v772
    %1697 = vmatmul.mubr.bf16.gmra.mxu0 %v771
    %v1698 = vpop.f32.mrf.mxu0
    %v1699 = vadd.f32 %v1538, %v1698
    %v1700 = vpop.f32.mrf.mxu0
    %v1701 = vpop.f32.mrf.mxu0
    %v1702 = vadd.f32 %v1541, %v1701
    %v1703 = vpop.f32.mrf.mxu0
    %1704 = vdwg.mxu0
    %1705 = vmatprep.subr.bf16.mxu0 0
    %1706 = vmatpush1.bf16.msra.mxu0 %v1165
    %1707 = vmatprep.subr.bf16.mxu0 0
    %1708 = vmatpush1.bf16.msra.mxu0 %v1164
    %1709 = vmatprep.subr.bf16.mxu0 0
    %1710 = vmatpush1.bf16.msra.mxu0 %v1163
    %1711 = vmatprep.subr.bf16.mxu0 0
    %1712 = vmatpush1.bf16.msra.mxu0 %v1162
    %1713 = vmatprep.subr.bf16.mxu0 0
    %1714 = vmatpush1.bf16.msra.mxu0 %v1161
    %1715 = vmatprep.subr.bf16.mxu0 0
    %1716 = vmatpush1.bf16.msra.mxu0 %v1160
    %1717 = vmatprep.subr.bf16.mxu0 0
    %1718 = vmatpush1.bf16.msra.mxu0 %v1159
    %1719 = vmatprep.subr.bf16.mxu0 0
    %1720 = vmatpush1.bf16.msra.mxu0 %v1158
    %1721 = vmatprep.subr.bf16.mxu0 0
    %1722 = vmatpush2.bf16.msra.mxu0 0
    %1723 = vmatprep.subr.bf16.mxu0 0
    %1724 = vmatpush2.bf16.msra.mxu0 0
    %1725 = vmatprep.subr.bf16.mxu0 0
    %1726 = vmatpush2.bf16.msra.mxu0 0
    %1727 = vmatprep.subr.bf16.mxu0 0
    %1728 = vmatpush2.bf16.msra.mxu0 0
    %1729 = vmatprep.subr.bf16.mxu0 0
    %1730 = vmatpush2.bf16.msra.mxu0 0
    %1731 = vmatprep.subr.bf16.mxu0 0
    %1732 = vmatpush2.bf16.msra.mxu0 0
    %1733 = vmatprep.subr.bf16.mxu0 0
    %1734 = vmatpush2.bf16.msra.mxu0 0
    %1735 = vmatprep.subr.bf16.mxu0 0
    %1736 = vmatpush2.bf16.msra.mxu0 0
    %1737 = vmatprep.mubr.bf16.mxu0 0
    %1738 = vmatmul.mubr.bf16.gmra.mxu0 %v668
    %v1739 = vpop.f32.mrf.mxu0
    %v1740 = vadd.f32 %v1579, %v1739
    %v1741 = vpop.f32.mrf.mxu0
    %v1742 = vpop.f32.mrf.mxu0
    %v1743 = vadd.f32 %v1582, %v1742
    %v1744 = vpop.f32.mrf.mxu0
    %1745 = vmatprep.mubr.bf16.mxu0 0
    %1746 = vmatmul.mubr.bf16.gmra.mxu0 %v675
    %v1747 = vpop.f32.mrf.mxu0
    %v1748 = vadd.f32 %v1587, %v1747
    %v1749 = vpop.f32.mrf.mxu0
    %v1750 = vpop.f32.mrf.mxu0
    %v1751 = vadd.f32 %v1590, %v1750
    %v1752 = vpop.f32.mrf.mxu0
    %1753 = vmatprep.mubr.bf16.mxu0 0
    %1754 = vmatmul.mubr.bf16.gmra.mxu0 %v682
    %v1755 = vpop.f32.mrf.mxu0
    %v1756 = vadd.f32 %v1595, %v1755
    %v1757 = vpop.f32.mrf.mxu0
    %v1758 = vpop.f32.mrf.mxu0
    %v1759 = vadd.f32 %v1598, %v1758
    %v1760 = vpop.f32.mrf.mxu0
    %1761 = vmatprep.mubr.bf16.mxu0 0
    %1762 = vmatmul.mubr.bf16.gmra.mxu0 %v689
    %v1763 = vpop.f32.mrf.mxu0
    %v1764 = vadd.f32 %v1603, %v1763
    %v1765 = vpop.f32.mrf.mxu0
    %v1766 = vpop.f32.mrf.mxu0
    %v1767 = vadd.f32 %v1606, %v1766
    %v1768 = vpop.f32.mrf.mxu0
    %1769 = vmatprep.mubr.bf16.mxu0 0
    %1770 = vmatmul.mubr.bf16.gmra.mxu0 %v696
    %v1771 = vpop.f32.mrf.mxu0
    %v1772 = vadd.f32 %v1611, %v1771
    %v1773 = vpop.f32.mrf.mxu0
    %v1774 = vpop.f32.mrf.mxu0
    %v1775 = vadd.f32 %v1614, %v1774
    %v1776 = vpop.f32.mrf.mxu0
    %1777 = vmatprep.mubr.bf16.mxu0 0
    %1778 = vmatmul.mubr.bf16.gmra.mxu0 %v703
    %v1779 = vpop.f32.mrf.mxu0
    %v1780 = vadd.f32 %v1619, %v1779
    %v1781 = vpop.f32.mrf.mxu0
    %v1782 = vpop.f32.mrf.mxu0
    %v1783 = vadd.f32 %v1622, %v1782
    %v1784 = vpop.f32.mrf.mxu0
    %1785 = vmatprep.mubr.bf16.mxu0 0
    %1786 = vmatmul.mubr.bf16.gmra.mxu0 %v710
    %v1787 = vpop.f32.mrf.mxu0
    %v1788 = vadd.f32 %v1627, %v1787
    %v1789 = vpop.f32.mrf.mxu0
    %v1790 = vpop.f32.mrf.mxu0
    %v1791 = vadd.f32 %v1630, %v1790
    %v1792 = vpop.f32.mrf.mxu0
    %1793 = vmatprep.mubr.bf16.mxu0 0
    %1794 = vmatmul.mubr.bf16.gmra.mxu0 %v717
    %v1795 = vpop.f32.mrf.mxu0
    %v1796 = vadd.f32 %v1635, %v1795
    %v1797 = vpop.f32.mrf.mxu0
    %v1798 = vpop.f32.mrf.mxu0
    %v1799 = vadd.f32 %v1638, %v1798
    %v1800 = vpop.f32.mrf.mxu0
    %1801 = vmatprep.mubr.bf16.mxu0 0
    %1802 = vmatmul.mubr.bf16.gmra.mxu0 %v724
    %v1803 = vpop.f32.mrf.mxu0
    %v1804 = vadd.f32 %v1643, %v1803
    %v1805 = vpop.f32.mrf.mxu0
    %v1806 = vpop.f32.mrf.mxu0
    %v1807 = vadd.f32 %v1646, %v1806
    %v1808 = vpop.f32.mrf.mxu0
    %1809 = vmatprep.mubr.bf16.mxu0 0
    %1810 = vmatmul.mubr.bf16.gmra.mxu0 %v731
    %v1811 = vpop.f32.mrf.mxu0
    %v1812 = vadd.f32 %v1651, %v1811
    %v1813 = vpop.f32.mrf.mxu0
    %v1814 = vpop.f32.mrf.mxu0
    %v1815 = vadd.f32 %v1654, %v1814
    %v1816 = vpop.f32.mrf.mxu0
    %1817 = vmatprep.mubr.bf16.mxu0 0
    %1818 = vmatmul.mubr.bf16.gmra.mxu0 %v738
    %v1819 = vpop.f32.mrf.mxu0
    %v1820 = vadd.f32 %v1659, %v1819
    %v1821 = vpop.f32.mrf.mxu0
    %v1822 = vpop.f32.mrf.mxu0
    %v1823 = vadd.f32 %v1662, %v1822
    %v1824 = vpop.f32.mrf.mxu0
    %1825 = vmatprep.mubr.bf16.mxu0 0
    %1826 = vmatmul.mubr.bf16.gmra.mxu0 %v745
    %v1827 = vpop.f32.mrf.mxu0
    %v1828 = vadd.f32 %v1667, %v1827
    %v1829 = vpop.f32.mrf.mxu0
    %v1830 = vpop.f32.mrf.mxu0
    %v1831 = vadd.f32 %v1670, %v1830
    %v1832 = vpop.f32.mrf.mxu0
    %1833 = vmatprep.mubr.bf16.mxu0 0
    %1834 = vmatmul.mubr.bf16.gmra.mxu0 %v752
    %v1835 = vpop.f32.mrf.mxu0
    %v1836 = vadd.f32 %v1675, %v1835
    %v1837 = vpop.f32.mrf.mxu0
    %v1838 = vpop.f32.mrf.mxu0
    %v1839 = vadd.f32 %v1678, %v1838
    %v1840 = vpop.f32.mrf.mxu0
    %1841 = vmatprep.mubr.bf16.mxu0 0
    %1842 = vmatmul.mubr.bf16.gmra.mxu0 %v759
    %v1843 = vpop.f32.mrf.mxu0
    %v1844 = vadd.f32 %v1683, %v1843
    %v1845 = vpop.f32.mrf.mxu0
    %v1846 = vpop.f32.mrf.mxu0
    %v1847 = vadd.f32 %v1686, %v1846
    %v1848 = vpop.f32.mrf.mxu0
    %1849 = vmatprep.mubr.bf16.mxu0 0
    %1850 = vmatmul.mubr.bf16.gmra.mxu0 %v766
    %v1851 = vpop.f32.mrf.mxu0
    %v1852 = vadd.f32 %v1691, %v1851
    %v1853 = vpop.f32.mrf.mxu0
    %v1854 = vpop.f32.mrf.mxu0
    %v1855 = vadd.f32 %v1694, %v1854
    %v1856 = vpop.f32.mrf.mxu0
    %1857 = vmatprep.mubr.bf16.mxu0 0
    %1858 = vmatmul.mubr.bf16.gmra.mxu0 %v773
    %v1859 = vpop.f32.mrf.mxu0
    %v1860 = vadd.f32 %v1699, %v1859
    %v1861 = vpop.f32.mrf.mxu0
    %v1862 = vpop.f32.mrf.mxu0
    %v1863 = vadd.f32 %v1702, %v1862
    %v1864 = vpop.f32.mrf.mxu0
    %1865 = vdwg.mxu0
    %v1866 = vmax.f32 %v1740, 0.0
    %v1867 = vmax.f32 %v1743, 0.0
    %v1868 = vmax.f32 %v1748, 0.0
    %v1869 = vmax.f32 %v1751, 0.0
    %v1870 = vmax.f32 %v1756, 0.0
    %v1871 = vmax.f32 %v1759, 0.0
    %v1872 = vmax.f32 %v1764, 0.0
    %v1873 = vmax.f32 %v1767, 0.0
    %v1874 = vmax.f32 %v1772, 0.0
    %v1875 = vmax.f32 %v1775, 0.0
    %v1876 = vmax.f32 %v1780, 0.0
    %v1877 = vmax.f32 %v1783, 0.0
    %v1878 = vmax.f32 %v1788, 0.0
    %v1879 = vmax.f32 %v1791, 0.0
    %v1880 = vmax.f32 %v1796, 0.0
    %v1881 = vmax.f32 %v1799, 0.0
    %v1882 = vmax.f32 %v1804, 0.0
    %v1883 = vmax.f32 %v1807, 0.0
    %v1884 = vmax.f32 %v1812, 0.0
    %v1885 = vmax.f32 %v1815, 0.0
    %v1886 = vmax.f32 %v1820, 0.0
    %v1887 = vmax.f32 %v1823, 0.0
    %v1888 = vmax.f32 %v1828, 0.0
    %v1889 = vmax.f32 %v1831, 0.0
    %v1890 = vmax.f32 %v1836, 0.0
    %v1891 = vmax.f32 %v1839, 0.0
    %v1892 = vmax.f32 %v1844, 0.0
    %v1893 = vmax.f32 %v1847, 0.0
    %v1894 = vmax.f32 %v1852, 0.0
    %v1895 = vmax.f32 %v1855, 0.0
    %v1896 = vmax.f32 %v1860, 0.0
    %v1897 = vmax.f32 %v1863, 0.0
    %v1898 = vpack.c.bf16 %v1867, %v1866
    %v1899 = vpack.c.bf16 %v1869, %v1868
    %v1900 = vpack.c.bf16 %v1871, %v1870
    %v1901 = vpack.c.bf16 %v1873, %v1872
    %v1902 = vpack.c.bf16 %v1875, %v1874
    %v1903 = vpack.c.bf16 %v1877, %v1876
    %v1904 = vpack.c.bf16 %v1879, %v1878
    %v1905 = vpack.c.bf16 %v1881, %v1880
    %v1906 = vpack.c.bf16 %v1883, %v1882
    %v1907 = vpack.c.bf16 %v1885, %v1884
    %v1908 = vpack.c.bf16 %v1887, %v1886
    %v1909 = vpack.c.bf16 %v1889, %v1888
    %v1910 = vpack.c.bf16 %v1891, %v1890
    %v1911 = vpack.c.bf16 %v1893, %v1892
    %v1912 = vpack.c.bf16 %v1895, %v1894
    %v1913 = vpack.c.bf16 %v1897, %v1896
    %v1914 = vld [vmem:[#allocation7] sm:$0xf]
    %v1915 = vld [vmem:[#allocation7 + $0x4] sm:$0xf]
    %v1916 = vld [vmem:[#allocation7 + $0x8] sm:$0xf]
    %v1917 = vld [vmem:[#allocation7 + $0xc] sm:$0xf]
    %v1918 = vld [vmem:[#allocation7 + $0x10] sm:$0xf]
    %v1919 = vld [vmem:[#allocation7 + $0x14] sm:$0xf]
    %v1920 = vld [vmem:[#allocation7 + $0x18] sm:$0xf]
    %v1921 = vld [vmem:[#allocation7 + $0x1c] sm:$0xf]
    %v1922 = vld [vmem:[#allocation7 + $0x20] sm:$0xf]
    %v1923 = vld [vmem:[#allocation7 + $0x24] sm:$0xf]
    %v1924 = vld [vmem:[#allocation7 + $0x28] sm:$0xf]
    %v1925 = vld [vmem:[#allocation7 + $0x2c] sm:$0xf]
    %v1926 = vld [vmem:[#allocation7 + $0x30] sm:$0xf]
    %v1927 = vld [vmem:[#allocation7 + $0x34] sm:$0xf]
    %v1928 = vld [vmem:[#allocation7 + $0x38] sm:$0xf]
    %v1929 = vld [vmem:[#allocation7 + $0x3c] sm:$0xf]
    %v1930 = vld [vmem:[%s4] sm:$0x1]
    %v1932 = vlaneseq
    %v1933 = vshrl.u32 %v1932, 7
    %v1934 = vsub.s32 0, %v1933
    %v1935 = vrot.slane %v1930, %v1934
    %v1953 = vunpack.c.l.b16 %v1914
    %v1954 = vunpack.c.l.b16 %v1915
    %v1955 = vunpack.c.l.b16 %v1916
    %v1956 = vunpack.c.l.b16 %v1917
    %v1957 = vunpack.c.l.b16 %v1918
    %v1958 = vunpack.c.l.b16 %v1919
    %v1959 = vunpack.c.l.b16 %v1920
    %v1960 = vunpack.c.l.b16 %v1921
    %v1961 = vunpack.c.l.b16 %v1922
    %v1962 = vunpack.c.l.b16 %v1923
    %v1963 = vunpack.c.l.b16 %v1924
    %v1964 = vunpack.c.l.b16 %v1925
    %v1965 = vunpack.c.l.b16 %v1926
    %v1966 = vunpack.c.l.b16 %v1927
    %v1967 = vunpack.c.l.b16 %v1928
    %v1968 = vunpack.c.l.b16 %v1929
    %v1969 = vpack.c.b16 %v1954, %v1953
    %v1970 = vpack.c.b16 %v1956, %v1955
    %v1971 = vpack.c.b16 %v1958, %v1957
    %v1972 = vpack.c.b16 %v1960, %v1959
    %v1973 = vpack.c.b16 %v1962, %v1961
    %v1974 = vpack.c.b16 %v1964, %v1963
    %v1975 = vpack.c.b16 %v1966, %v1965
    %v1976 = vpack.c.b16 %v1968, %v1967
    %1985 = vmatprep.subr.bf16.mxu0 0
    %1986 = vmatpush1.bf16.msra.mxu0 %v1976
    %1987 = vmatprep.subr.bf16.mxu0 0
    %1988 = vmatpush1.bf16.msra.mxu0 %v1975
    %1989 = vmatprep.subr.bf16.mxu0 0
    %1990 = vmatpush1.bf16.msra.mxu0 %v1974
    %1991 = vmatprep.subr.bf16.mxu0 0
    %1992 = vmatpush1.bf16.msra.mxu0 %v1973
    %1993 = vmatprep.subr.bf16.mxu0 0
    %1994 = vmatpush1.bf16.msra.mxu0 %v1972
    %1995 = vmatprep.subr.bf16.mxu0 0
    %1996 = vmatpush1.bf16.msra.mxu0 %v1971
    %1997 = vmatprep.subr.bf16.mxu0 0
    %1998 = vmatpush1.bf16.msra.mxu0 %v1970
    %1999 = vmatprep.subr.bf16.mxu0 0
    %2000 = vmatpush1.bf16.msra.mxu0 %v1969
    %2001 = vmatprep.subr.bf16.mxu0 0
    %2002 = vmatpush2.bf16.msra.mxu0 0
    %2003 = vmatprep.subr.bf16.mxu0 0
    %2004 = vmatpush2.bf16.msra.mxu0 0
    %2005 = vmatprep.subr.bf16.mxu0 0
    %2006 = vmatpush2.bf16.msra.mxu0 0
    %2007 = vmatprep.subr.bf16.mxu0 0
    %2008 = vmatpush2.bf16.msra.mxu0 0
    %2009 = vmatprep.subr.bf16.mxu0 0
    %2010 = vmatpush2.bf16.msra.mxu0 0
    %2011 = vmatprep.subr.bf16.mxu0 0
    %2012 = vmatpush2.bf16.msra.mxu0 0
    %2013 = vmatprep.subr.bf16.mxu0 0
    %2014 = vmatpush2.bf16.msra.mxu0 0
    %2015 = vmatprep.subr.bf16.mxu0 0
    %2016 = vmatpush2.bf16.msra.mxu0 0
    %2017 = vmatprep.mubr.bf16.mxu0 0
    %2018 = vmatmul.mubr.bf16.gmra.mxu0 %v1898
    %v2019 = vpop.f32.mrf.mxu0
    %v2020 = vadd.f32 %v1935, %v2019
    %v2021 = vpop.f32.mrf.mxu0
    %v2022 = vpop.f32.mrf.mxu0
    %v2023 = vadd.f32 %v1935, %v2022
    %v2024 = vpop.f32.mrf.mxu0
    %2025 = vmatprep.mubr.bf16.mxu0 0
    %2026 = vmatmul.mubr.bf16.gmra.mxu0 %v1899
    %v2027 = vpop.f32.mrf.mxu0
    %v2028 = vadd.f32 %v1935, %v2027
    %v2029 = vpop.f32.mrf.mxu0
    %v2030 = vpop.f32.mrf.mxu0
    %v2031 = vadd.f32 %v1935, %v2030
    %v2032 = vpop.f32.mrf.mxu0
    %2033 = vmatprep.mubr.bf16.mxu0 0
    %2034 = vmatmul.mubr.bf16.gmra.mxu0 %v1900
    %v2035 = vpop.f32.mrf.mxu0
    %v2036 = vadd.f32 %v1935, %v2035
    %v2037 = vpop.f32.mrf.mxu0
    %v2038 = vpop.f32.mrf.mxu0
    %v2039 = vadd.f32 %v1935, %v2038
    %v2040 = vpop.f32.mrf.mxu0
    %2041 = vmatprep.mubr.bf16.mxu0 0
    %2042 = vmatmul.mubr.bf16.gmra.mxu0 %v1901
    %v2043 = vpop.f32.mrf.mxu0
    %v2044 = vadd.f32 %v1935, %v2043
    %v2045 = vpop.f32.mrf.mxu0
    %v2046 = vpop.f32.mrf.mxu0
    %v2047 = vadd.f32 %v1935, %v2046
    %v2048 = vpop.f32.mrf.mxu0
    %2049 = vmatprep.mubr.bf16.mxu0 0
    %2050 = vmatmul.mubr.bf16.gmra.mxu0 %v1902
    %v2051 = vpop.f32.mrf.mxu0
    %v2052 = vadd.f32 %v1935, %v2051
    %v2053 = vpop.f32.mrf.mxu0
    %v2054 = vpop.f32.mrf.mxu0
    %v2055 = vadd.f32 %v1935, %v2054
    %v2056 = vpop.f32.mrf.mxu0
    %2057 = vmatprep.mubr.bf16.mxu0 0
    %2058 = vmatmul.mubr.bf16.gmra.mxu0 %v1903
    %v2059 = vpop.f32.mrf.mxu0
    %v2060 = vadd.f32 %v1935, %v2059
    %v2061 = vpop.f32.mrf.mxu0
    %v2062 = vpop.f32.mrf.mxu0
    %v2063 = vadd.f32 %v1935, %v2062
    %v2064 = vpop.f32.mrf.mxu0
    %2065 = vmatprep.mubr.bf16.mxu0 0
    %2066 = vmatmul.mubr.bf16.gmra.mxu0 %v1904
    %v2067 = vpop.f32.mrf.mxu0
    %v2068 = vadd.f32 %v1935, %v2067
    %v2069 = vpop.f32.mrf.mxu0
    %v2070 = vpop.f32.mrf.mxu0
    %v2071 = vadd.f32 %v1935, %v2070
    %v2072 = vpop.f32.mrf.mxu0
    %2073 = vmatprep.mubr.bf16.mxu0 0
    %2074 = vmatmul.mubr.bf16.gmra.mxu0 %v1905
    %v2075 = vpop.f32.mrf.mxu0
    %v2076 = vadd.f32 %v1935, %v2075
    %v2077 = vpop.f32.mrf.mxu0
    %v2078 = vpop.f32.mrf.mxu0
    %v2079 = vadd.f32 %v1935, %v2078
    %v2080 = vpop.f32.mrf.mxu0
    %2081 = vmatprep.mubr.bf16.mxu0 0
    %2082 = vmatmul.mubr.bf16.gmra.mxu0 %v1906
    %v2083 = vpop.f32.mrf.mxu0
    %v2084 = vadd.f32 %v1935, %v2083
    %v2085 = vpop.f32.mrf.mxu0
    %v2086 = vpop.f32.mrf.mxu0
    %v2087 = vadd.f32 %v1935, %v2086
    %v2088 = vpop.f32.mrf.mxu0
    %2089 = vmatprep.mubr.bf16.mxu0 0
    %2090 = vmatmul.mubr.bf16.gmra.mxu0 %v1907
    %v2091 = vpop.f32.mrf.mxu0
    %v2092 = vadd.f32 %v1935, %v2091
    %v2093 = vpop.f32.mrf.mxu0
    %v2094 = vpop.f32.mrf.mxu0
    %v2095 = vadd.f32 %v1935, %v2094
    %v2096 = vpop.f32.mrf.mxu0
    %2097 = vmatprep.mubr.bf16.mxu0 0
    %2098 = vmatmul.mubr.bf16.gmra.mxu0 %v1908
    %v2099 = vpop.f32.mrf.mxu0
    %v2100 = vadd.f32 %v1935, %v2099
    %v2101 = vpop.f32.mrf.mxu0
    %v2102 = vpop.f32.mrf.mxu0
    %v2103 = vadd.f32 %v1935, %v2102
    %v2104 = vpop.f32.mrf.mxu0
    %2105 = vmatprep.mubr.bf16.mxu0 0
    %2106 = vmatmul.mubr.bf16.gmra.mxu0 %v1909
    %v2107 = vpop.f32.mrf.mxu0
    %v2108 = vadd.f32 %v1935, %v2107
    %v2109 = vpop.f32.mrf.mxu0
    %v2110 = vpop.f32.mrf.mxu0
    %v2111 = vadd.f32 %v1935, %v2110
    %v2112 = vpop.f32.mrf.mxu0
    %2113 = vmatprep.mubr.bf16.mxu0 0
    %2114 = vmatmul.mubr.bf16.gmra.mxu0 %v1910
    %v2115 = vpop.f32.mrf.mxu0
    %v2116 = vadd.f32 %v1935, %v2115
    %v2117 = vpop.f32.mrf.mxu0
    %v2118 = vpop.f32.mrf.mxu0
    %v2119 = vadd.f32 %v1935, %v2118
    %v2120 = vpop.f32.mrf.mxu0
    %2121 = vmatprep.mubr.bf16.mxu0 0
    %2122 = vmatmul.mubr.bf16.gmra.mxu0 %v1911
    %v2123 = vpop.f32.mrf.mxu0
    %v2124 = vadd.f32 %v1935, %v2123
    %v2125 = vpop.f32.mrf.mxu0
    %v2126 = vpop.f32.mrf.mxu0
    %v2127 = vadd.f32 %v1935, %v2126
    %v2128 = vpop.f32.mrf.mxu0
    %2129 = vmatprep.mubr.bf16.mxu0 0
    %2130 = vmatmul.mubr.bf16.gmra.mxu0 %v1912
    %v2131 = vpop.f32.mrf.mxu0
    %v2132 = vadd.f32 %v1935, %v2131
    %v2133 = vpop.f32.mrf.mxu0
    %v2134 = vpop.f32.mrf.mxu0
    %v2135 = vadd.f32 %v1935, %v2134
    %v2136 = vpop.f32.mrf.mxu0
    %2137 = vmatprep.mubr.bf16.mxu0 0
    %2138 = vmatmul.mubr.bf16.gmra.mxu0 %v1913
    %v2139 = vpop.f32.mrf.mxu0
    %v2140 = vadd.f32 %v1935, %v2139
    %v2141 = vpop.f32.mrf.mxu0
    %v2142 = vpop.f32.mrf.mxu0
    %v2143 = vadd.f32 %v1935, %v2142
    %v2144 = vpop.f32.mrf.mxu0
    %2145 = vdwg.mxu0
    %2146 = vst [vmem:[#allocation8] sm:$0xff] %v2020
    %2147 = vst [vmem:[#allocation8 + $0x8] sm:$0xff] %v2023
    %2148 = vst [vmem:[#allocation8 + $0x10] sm:$0xff] %v2028
    %2149 = vst [vmem:[#allocation8 + $0x18] sm:$0xff] %v2031
    %2150 = vst [vmem:[#allocation8 + $0x20] sm:$0xff] %v2036
    %2151 = vst [vmem:[#allocation8 + $0x28] sm:$0xff] %v2039
    %2152 = vst [vmem:[#allocation8 + $0x30] sm:$0xff] %v2044
    %2153 = vst [vmem:[#allocation8 + $0x38] sm:$0xff] %v2047
    %2154 = vst [vmem:[#allocation8 + $0x40] sm:$0xff] %v2052
    %2155 = vst [vmem:[#allocation8 + $0x48] sm:$0xff] %v2055
    %2156 = vst [vmem:[#allocation8 + $0x50] sm:$0xff] %v2060
    %2157 = vst [vmem:[#allocation8 + $0x58] sm:$0xff] %v2063
    %2158 = vst [vmem:[#allocation8 + $0x60] sm:$0xff] %v2068
    %2159 = vst [vmem:[#allocation8 + $0x68] sm:$0xff] %v2071
    %2160 = vst [vmem:[#allocation8 + $0x70] sm:$0xff] %v2076
    %2161 = vst [vmem:[#allocation8 + $0x78] sm:$0xff] %v2079
    %2162 = vst [vmem:[#allocation8 + $0x80] sm:$0xff] %v2084
    %2163 = vst [vmem:[#allocation8 + $0x88] sm:$0xff] %v2087
    %2164 = vst [vmem:[#allocation8 + $0x90] sm:$0xff] %v2092
    %2165 = vst [vmem:[#allocation8 + $0x98] sm:$0xff] %v2095
    %2166 = vst [vmem:[#allocation8 + $0xa0] sm:$0xff] %v2100
    %2167 = vst [vmem:[#allocation8 + $0xa8] sm:$0xff] %v2103
    %2168 = vst [vmem:[#allocation8 + $0xb0] sm:$0xff] %v2108
    %2169 = vst [vmem:[#allocation8 + $0xb8] sm:$0xff] %v2111
    %2170 = vst [vmem:[#allocation8 + $0xc0] sm:$0xff] %v2116
    %2171 = vst [vmem:[#allocation8 + $0xc8] sm:$0xff] %v2119
    %2172 = vst [vmem:[#allocation8 + $0xd0] sm:$0xff] %v2124
    %2173 = vst [vmem:[#allocation8 + $0xd8] sm:$0xff] %v2127
    %2174 = vst [vmem:[#allocation8 + $0xe0] sm:$0xff] %v2132
    %2175 = vst [vmem:[#allocation8 + $0xe8] sm:$0xff] %v2135
    %2176 = vst [vmem:[#allocation8 + $0xf0] sm:$0xff] %v2140
    %2177 = vst [vmem:[#allocation8 + $0xf8] sm:$0xff] %v2143
    // Predicated region
    $region34: #{tpu_custom_call.1} parent=1 // pred_check
      _
    $region35: #{tpu_custom_call.1} parent=1 // pred_check_branch
      %2179 = sbr.rel (0) target = $region37
    $region36: #{tpu_custom_call.1} parent=1 // pred_region
      %s2181 = ssub.s32 4096, 4096
      %2182 = vsyncadd [#allocation4], %s2181
      %s2183 = sshll.u32 [#allocation8], 4
      %s2184 = int_to_ptr.vmem [resolvable:$true] %s2183
      %2189 = dma.vmem_to_hbm [thread:$0]  %s2184, 4096, %s5, [#allocation4], 128, 128, 8
    $region37: #{tpu_custom_call.1} parent=1 // pred_fallthru
      _
    // Predicated region
    $region38: #{tpu_custom_call.1} parent=1 // pred_check
      _
    $region39: #{tpu_custom_call.1} parent=1 // pred_check_branch
      %2191 = sbr.rel (0) target = $region41
    $region40: #{tpu_custom_call.1} parent=1 // pred_region
      %2192 = dma.done [#allocation4], 4096
    $region41: #{tpu_custom_call.1} parent=1 // pred_fallthru
      _
    %2193 = vsyncpa [#allocation3], 1
    %2194 = vsyncpa [#allocation6], 1
    %2195 = vsyncpa [#allocation4], 1

</llo_original>
